<compile_context>
chip_gen: v7x
topology: tpu7x:2x2x1
jax: 0.10.0
libtpu: 0.0.40
codegen_flags: <defaults>
</compile_context>

<pallas_src>
import functools

import jax
import jax.numpy as jnp
from jax import lax
from jax.experimental import pallas as pl
from jax.experimental.pallas import tpu as pltpu


def _attention_kernel(x_ref, gamma_ref, beta_ref, wq_ref, wk_ref, wv_ref,
                      wout_ref, bout_ref, o_ref, *, block_b, seq, heads,
                      dim_head, scale, eps):
    inner = heads * dim_head
    rows = block_b * seq
    dtype = x_ref.dtype                      # native compute dtype for the MXU

    # ---- LayerNorm over the feature dim (statistics in f32) ---------------
    x = x_ref[...].reshape(rows, -1)                        # (rows, D)
    xf = x.astype(jnp.float32)
    mean = jnp.mean(xf, axis=-1, keepdims=True)
    var = jnp.mean(jnp.square(xf - mean), axis=-1, keepdims=True)
    xn = (xf - mean) * lax.rsqrt(var + eps)
    xn = xn * gamma_ref[...].astype(jnp.float32) + beta_ref[...].astype(jnp.float32)
    xn = xn.astype(dtype)                                   # feed MXU natively

    # ---- Q/K/V projections (no bias); softmax scale folded into Q ---------
    q = (jnp.dot(xn, wq_ref[...], preferred_element_type=jnp.float32)
         * scale).astype(dtype)                             # (rows, inner)
    k = jnp.dot(xn, wk_ref[...],
                preferred_element_type=jnp.float32).astype(dtype)
    v = jnp.dot(xn, wv_ref[...],
                preferred_element_type=jnp.float32).astype(dtype)

    q3 = q.reshape(block_b, seq, inner)
    k3 = k.reshape(block_b, seq, inner)
    v3 = v.reshape(block_b, seq, inner)

    # ---- per-head attention (leading-batch einsums, no head transposes) ---
    out_heads = []
    for h in range(heads):                                  # heads is static
        sl = slice(h * dim_head, (h + 1) * dim_head)
        qh, kh, vh = q3[:, :, sl], k3[:, :, sl], v3[:, :, sl]
        s = jnp.einsum('bnd,bmd->bnm', qh, kh,
                       preferred_element_type=jnp.float32)  # (B, N, N) f32
        m = jnp.max(s, axis=-1, keepdims=True)
        p = jnp.exp(s - m)
        l = jnp.sum(p, axis=-1, keepdims=True)
        attn = p * pl.reciprocal(l, approx=True)
        # dropout p=0.0 -> identity at inference; omitted.
        oh = jnp.einsum('bnm,bmd->bnd', attn.astype(dtype), vh,
                        preferred_element_type=jnp.float32)  # (B, N, dh)
        out_heads.append(oh)

    out = jnp.concatenate(out_heads, axis=-1)               # (B, N, inner) f32
    out = out.reshape(rows, inner).astype(dtype)

    # ---- output projection -------------------------------------------------
    y = jnp.dot(out, wout_ref[...], preferred_element_type=jnp.float32)
    y = y + bout_ref[...].astype(jnp.float32)               # (rows, D)
    o_ref[...] = y.reshape(block_b, seq, -1).astype(o_ref.dtype)


def _pick_block_b(B, N, heads):
    """Largest batch block with <=1024 matmul rows and a bounded per-head
    f32 score tensor (block_b * N * N * 4B <= ~4 MiB); keep >=2 grid steps
    when possible so the parallel axis can span v7x's two TensorCores."""
    score_budget = 4 * 1024 * 1024
    best = 1
    for tb in range(1, B + 1):
        if B % tb != 0:
            continue
        if tb * N > 1024:
            continue
        if tb * N * N * 4 > score_budget:
            continue
        best = tb
    if B // best == 1 and B >= 2:
        for tb in range(best, 0, -1):
            if B % tb == 0 and B // tb >= 2:
                return tb
    return best


def attention_pallas(x, gamma, beta, w_qkv, w_out, b_out, *, heads, dim_head,
                     block_b=None):
    B, N, D = x.shape
    inner = heads * dim_head
    assert w_qkv.shape == (D, 3 * inner)
    scale = float(dim_head) ** -0.5

    if block_b is None:
        block_b = _pick_block_b(B, N, heads)
    if B % block_b != 0:
        raise ValueError(f"block_b={block_b} must divide batch={B}")
    grid_b = B // block_b

    # Split QKV weight once on the host side -> three lane-contiguous inputs,
    # no unaligned column slicing inside the kernel.
    w_q, w_k, w_v = jnp.split(w_qkv, 3, axis=1)

    gamma2 = gamma.reshape(1, D)
    beta2 = beta.reshape(1, D)
    bout2 = b_out.reshape(1, D)

    kernel = functools.partial(_attention_kernel, block_b=block_b, seq=N,
                               heads=heads, dim_head=dim_head, scale=scale,
                               eps=1e-5)

    itemsize = x.dtype.itemsize
    flops = int(2 * B * N * D * 3 * inner              # qkv projection
                + 4 * B * heads * N * N * dim_head     # qk^T and attn@v
                + 2 * B * N * inner * D)               # out projection
    transcendentals = int(B * heads * N * N)           # exp in softmax
    bytes_accessed = int(2 * B * N * D * itemsize                     # x + out
                         + (3 * D * inner + inner * D) * w_qkv.dtype.itemsize
                         + 3 * D * gamma.dtype.itemsize)              # ln/bias

    return pl.pallas_call(
        kernel,
        out_shape=jax.ShapeDtypeStruct((B, N, D), x.dtype),
        grid_spec=pltpu.PrefetchScalarGridSpec(
            num_scalar_prefetch=0,
            grid=(grid_b,),
            in_specs=[
                pl.BlockSpec((block_b, N, D), lambda i: (i, 0, 0)),   # x
                pl.BlockSpec((1, D), lambda i: (0, 0)),               # gamma
                pl.BlockSpec((1, D), lambda i: (0, 0)),               # beta
                pl.BlockSpec((D, inner), lambda i: (0, 0)),           # w_q
                pl.BlockSpec((D, inner), lambda i: (0, 0)),           # w_k
                pl.BlockSpec((D, inner), lambda i: (0, 0)),           # w_v
                pl.BlockSpec((inner, D), lambda i: (0, 0)),           # w_out
                pl.BlockSpec((1, D), lambda i: (0, 0)),               # b_out
            ],
            out_specs=pl.BlockSpec((block_b, N, D), lambda i: (i, 0, 0)),
        ),
        compiler_params=pltpu.CompilerParams(
            dimension_semantics=("parallel",),
            vmem_limit_bytes=64 * 1024 * 1024),
        cost_estimate=pl.CostEstimate(flops=flops,
                                      transcendentals=transcendentals,
                                      bytes_accessed=bytes_accessed),
    )(x, gamma2, beta2, w_q, w_k, w_v, w_out, bout2)


def attention_reference(x, gamma, beta, w_qkv, w_out, b_out, *, heads, dim_head):
    """Pure-JAX reference mirroring the PyTorch forward (dropout=0), in f32."""
    B, N, D = x.shape
    inner = heads * dim_head
    scale = float(dim_head) ** -0.5
    xf = x.astype(jnp.float32)
    mean = jnp.mean(xf, axis=-1, keepdims=True)
    var = jnp.mean((xf - mean) ** 2, axis=-1, keepdims=True)
    xn = (xf - mean) / jnp.sqrt(var + 1e-5) * gamma.astype(jnp.float32) \
        + beta.astype(jnp.float32)
    qkv = xn @ w_qkv.astype(jnp.float32)
    q, k, v = jnp.split(qkv, 3, axis=-1)

    def split_heads(t):
        return t.reshape(B, N, heads, dim_head).transpose(0, 2, 1, 3)

    q, k, v = map(split_heads, (q, k, v))
    dots = jnp.einsum('bhnd,bhmd->bhnm', q, k) * scale
    attn = jax.nn.softmax(dots, axis=-1)
    out = jnp.einsum('bhnm,bhmd->bhnd', attn, v)
    out = out.transpose(0, 2, 1, 3).reshape(B, N, inner)
    return out @ w_out.astype(jnp.float32) + b_out.astype(jnp.float32)


if __name__ == "__main__":
    # Small shapes consistent with the module: Attention(dim=32, heads=4, dim_head=8)
    B, N, D = 2, 8, 32
    heads, dim_head = 4, 8
    inner = heads * dim_head

    key = jax.random.PRNGKey(0)
    kx, kq, ko, kb = jax.random.split(key, 4)

    x = jax.random.normal(kx, (B, N, D), dtype=jnp.float32)
    gamma = jnp.ones((D,), jnp.float32)                                 # LayerNorm weight
    beta = jnp.zeros((D,), jnp.float32)                                 # LayerNorm bias
    w_qkv = jax.random.normal(kq, (D, 3 * inner), jnp.float32) * 0.05   # Linear(D, 3*inner, bias=False)
    w_out = jax.random.normal(ko, (inner, D), jnp.float32) * 0.05       # Linear(inner, D)
    b_out = jax.random.normal(kb, (D,), jnp.float32) * 0.01

    # --- f32 path ---------------------------------------------------------
    y = attention_pallas(x, gamma, beta, w_qkv, w_out, b_out,
                         heads=heads, dim_head=dim_head)
    y = jax.block_until_ready(y)
    y_ref = attention_reference(x, gamma, beta, w_qkv, w_out, b_out,
                                heads=heads, dim_head=dim_head)
    assert jnp.allclose(y, y_ref.astype(y.dtype), atol=2e-3, rtol=2e-3), \
        "f32 mismatch vs reference"

    # --- bf16 path (MXU operands stay bf16, f32 accumulation) --------------
    to_bf16 = lambda a: a.astype(jnp.bfloat16)
    xb, gb, bb, wqkvb, woutb, boutb = map(
        to_bf16, (x, gamma, beta, w_qkv, w_out, b_out))
    yb = attention_pallas(xb, gb, bb, wqkvb, woutb, boutb,
                          heads=heads, dim_head=dim_head)
    yb = jax.block_until_ready(yb)
    yb_ref = attention_reference(xb.astype(jnp.float32), gb, bb,
                                 wqkvb, woutb, boutb,
                                 heads=heads, dim_head=dim_head)
    assert jnp.allclose(yb.astype(jnp.float32), yb_ref, atol=5e-2, rtol=5e-2), \
        "bf16 mismatch vs reference"

    print("KERNEL_OK")
</pallas_src>

<mosaic_0001>
module attributes {stable_mosaic.version = 11 : i64} {
  func.func @_attention_kernel(%arg0: i32, %arg1: memref<1x8x32xf32, #tpu.memory_space<vmem>>, %arg2: memref<1x32xf32, #tpu.memory_space<vmem>>, %arg3: memref<1x32xf32, #tpu.memory_space<vmem>>, %arg4: memref<32x32xf32, #tpu.memory_space<vmem>>, %arg5: memref<32x32xf32, #tpu.memory_space<vmem>>, %arg6: memref<32x32xf32, #tpu.memory_space<vmem>>, %arg7: memref<32x32xf32, #tpu.memory_space<vmem>>, %arg8: memref<1x32xf32, #tpu.memory_space<vmem>>, %arg9: memref<1x8x32xf32, #tpu.memory_space<vmem>>) attributes {dimension_semantics = [#tpu.dimension_semantics<parallel>], iteration_bounds = array<i64: 2>, scalar_prefetch = 0 : i64, scratch_operands = 0 : i64, tpu.core_type = #tpu.core_type<tc>, window_params = [{transform_indices = @transform_0, window_bounds = array<i64: 1, 8, 32>}, {pipeline_mode = #tpu.pipeline_mode<synchronous>, transform_indices = @transform_1, window_bounds = array<i64: 1, 32>}, {pipeline_mode = #tpu.pipeline_mode<synchronous>, transform_indices = @transform_2, window_bounds = array<i64: 1, 32>}, {pipeline_mode = #tpu.pipeline_mode<synchronous>, transform_indices = @transform_3, window_bounds = array<i64: 32, 32>}, {pipeline_mode = #tpu.pipeline_mode<synchronous>, transform_indices = @transform_4, window_bounds = array<i64: 32, 32>}, {pipeline_mode = #tpu.pipeline_mode<synchronous>, transform_indices = @transform_5, window_bounds = array<i64: 32, 32>}, {pipeline_mode = #tpu.pipeline_mode<synchronous>, transform_indices = @transform_6, window_bounds = array<i64: 32, 32>}, {pipeline_mode = #tpu.pipeline_mode<synchronous>, transform_indices = @transform_7, window_bounds = array<i64: 1, 32>}, {transform_indices = @transform_8, window_bounds = array<i64: 1, 8, 32>}]} {
    %c0 = arith.constant 0 : index
    %c0_0 = arith.constant 0 : index
    %c0_1 = arith.constant 0 : index
    %0 = vector.load %arg1[%c0, %c0_0, %c0_1] : memref<1x8x32xf32, #tpu.memory_space<vmem>>, vector<1x8x32xf32>
    %1 = vector.shape_cast %0 : vector<1x8x32xf32> to vector<8x32xf32>
    %cst = arith.constant dense<0.000000e+00> : vector<8xf32>
    %2 = vector.multi_reduction <add>, %1, %cst [1] : vector<8x32xf32> to vector<8xf32>
    %3 = vector.shape_cast %2 : vector<8xf32> to vector<8x1xf32>
    %cst_2 = arith.constant 3.200000e+01 : f32
    %4 = vector.broadcast %cst_2 : f32 to vector<8x1xf32>
    %5 = arith.divf %3, %4 : vector<8x1xf32>
    %6 = vector.broadcast %5 : vector<8x1xf32> to vector<8x32xf32>
    %7 = arith.subf %1, %6 : vector<8x32xf32>
    %8 = arith.mulf %7, %7 : vector<8x32xf32>
    %cst_3 = arith.constant dense<0.000000e+00> : vector<8xf32>
    %9 = vector.multi_reduction <add>, %8, %cst_3 [1] : vector<8x32xf32> to vector<8xf32>
    %10 = vector.shape_cast %9 : vector<8xf32> to vector<8x1xf32>
    %cst_4 = arith.constant 3.200000e+01 : f32
    %11 = vector.broadcast %cst_4 : f32 to vector<8x1xf32>
    %12 = arith.divf %10, %11 : vector<8x1xf32>
    %13 = vector.broadcast %5 : vector<8x1xf32> to vector<8x32xf32>
    %14 = arith.subf %1, %13 : vector<8x32xf32>
    %cst_5 = arith.constant 9.99999974E-6 : f32
    %15 = vector.broadcast %cst_5 : f32 to vector<8x1xf32>
    %16 = arith.addf %12, %15 : vector<8x1xf32>
    %17 = math.rsqrt %16 : vector<8x1xf32>
    %18 = vector.broadcast %17 : vector<8x1xf32> to vector<8x32xf32>
    %19 = arith.mulf %14, %18 : vector<8x32xf32>
    %c0_6 = arith.constant 0 : index
    %c0_7 = arith.constant 0 : index
    %20 = vector.load %arg2[%c0_6, %c0_7] : memref<1x32xf32, #tpu.memory_space<vmem>>, vector<1x32xf32>
    %21 = vector.broadcast %20 : vector<1x32xf32> to vector<8x32xf32>
    %22 = arith.mulf %19, %21 : vector<8x32xf32>
    %c0_8 = arith.constant 0 : index
    %c0_9 = arith.constant 0 : index
    %23 = vector.load %arg3[%c0_8, %c0_9] : memref<1x32xf32, #tpu.memory_space<vmem>>, vector<1x32xf32>
    %24 = vector.broadcast %23 : vector<1x32xf32> to vector<8x32xf32>
    %25 = arith.addf %22, %24 : vector<8x32xf32>
    %c0_10 = arith.constant 0 : index
    %c0_11 = arith.constant 0 : index
    %26 = vector.load %arg4[%c0_10, %c0_11] : memref<32x32xf32, #tpu.memory_space<vmem>>, vector<32x32xf32>
    %cst_12 = arith.constant dense<0.000000e+00> : vector<8x32xf32>
    %27 = tpu.matmul %25, %26, %cst_12 {dimension_numbers = #tpu.dot_dimension_numbers<[1], [0], [0], [1], [0, 0, 1, 1], [], []>} : vector<8x32xf32>, vector<32x32xf32>, vector<8x32xf32> -> vector<8x32xf32>
    %cst_13 = arith.constant 0.353553385 : f32
    %28 = vector.broadcast %cst_13 : f32 to vector<8x32xf32>
    %29 = arith.mulf %27, %28 : vector<8x32xf32>
    %c0_14 = arith.constant 0 : index
    %c0_15 = arith.constant 0 : index
    %30 = vector.load %arg5[%c0_14, %c0_15] : memref<32x32xf32, #tpu.memory_space<vmem>>, vector<32x32xf32>
    %cst_16 = arith.constant dense<0.000000e+00> : vector<8x32xf32>
    %31 = tpu.matmul %25, %30, %cst_16 {dimension_numbers = #tpu.dot_dimension_numbers<[1], [0], [0], [1], [0, 0, 1, 1], [], []>} : vector<8x32xf32>, vector<32x32xf32>, vector<8x32xf32> -> vector<8x32xf32>
    %c0_17 = arith.constant 0 : index
    %c0_18 = arith.constant 0 : index
    %32 = vector.load %arg6[%c0_17, %c0_18] : memref<32x32xf32, #tpu.memory_space<vmem>>, vector<32x32xf32>
    %cst_19 = arith.constant dense<0.000000e+00> : vector<8x32xf32>
    %33 = tpu.matmul %25, %32, %cst_19 {dimension_numbers = #tpu.dot_dimension_numbers<[1], [0], [0], [1], [0, 0, 1, 1], [], []>} : vector<8x32xf32>, vector<32x32xf32>, vector<8x32xf32> -> vector<8x32xf32>
    %34 = vector.shape_cast %29 : vector<8x32xf32> to vector<1x8x32xf32>
    %35 = vector.shape_cast %31 : vector<8x32xf32> to vector<1x8x32xf32>
    %36 = vector.shape_cast %33 : vector<8x32xf32> to vector<1x8x32xf32>
    %37 = vector.extract_strided_slice %34 {offsets = [0, 0, 0], sizes = [1, 8, 8], strides = [1, 1, 1]} : vector<1x8x32xf32> to vector<1x8x8xf32>
    %38 = vector.extract_strided_slice %35 {offsets = [0, 0, 0], sizes = [1, 8, 8], strides = [1, 1, 1]} : vector<1x8x32xf32> to vector<1x8x8xf32>
    %39 = vector.extract_strided_slice %36 {offsets = [0, 0, 0], sizes = [1, 8, 8], strides = [1, 1, 1]} : vector<1x8x32xf32> to vector<1x8x8xf32>
    "tpu.trace_start"() <{level = 10 : i32, message = "bnd,bmd->bnm"}> : () -> ()
    %cst_20 = arith.constant dense<0.000000e+00> : vector<1x8x8xf32>
    %40 = tpu.matmul %37, %38, %cst_20 {dimension_numbers = #tpu.dot_dimension_numbers<[2], [2], [1], [1], [0, 0, 0, 1, 1, 1], [0], [0]>} : vector<1x8x8xf32>, vector<1x8x8xf32>, vector<1x8x8xf32> -> vector<1x8x8xf32>
    "tpu.trace_stop"() : () -> ()
    %cst_21 = arith.constant dense<0xFF800000> : vector<1x8xf32>
    %41 = vector.multi_reduction <maximumf>, %40, %cst_21 [2] : vector<1x8x8xf32> to vector<1x8xf32>
    %42 = vector.shape_cast %41 : vector<1x8xf32> to vector<1x8x1xf32>
    %43 = vector.broadcast %42 : vector<1x8x1xf32> to vector<1x8x8xf32>
    %44 = arith.subf %40, %43 : vector<1x8x8xf32>
    %45 = math.exp %44 : vector<1x8x8xf32>
    %cst_22 = arith.constant dense<0.000000e+00> : vector<1x8xf32>
    %46 = vector.multi_reduction <add>, %45, %cst_22 [2] : vector<1x8x8xf32> to vector<1x8xf32>
    %47 = vector.shape_cast %46 : vector<1x8xf32> to vector<1x8x1xf32>
    %48 = tpu.reciprocal %47 {approx = true} : vector<1x8x1xf32> -> vector<1x8x1xf32>
    %49 = vector.broadcast %48 : vector<1x8x1xf32> to vector<1x8x8xf32>
    %50 = arith.mulf %45, %49 : vector<1x8x8xf32>
    "tpu.trace_start"() <{level = 10 : i32, message = "bnm,bmd->bnd"}> : () -> ()
    %cst_23 = arith.constant dense<0.000000e+00> : vector<1x8x8xf32>
    %51 = tpu.matmul %50, %39, %cst_23 {dimension_numbers = #tpu.dot_dimension_numbers<[2], [1], [1], [2], [0, 0, 0, 1, 1, 2], [0], [0]>} : vector<1x8x8xf32>, vector<1x8x8xf32>, vector<1x8x8xf32> -> vector<1x8x8xf32>
    "tpu.trace_stop"() : () -> ()
    %52 = vector.extract_strided_slice %34 {offsets = [0, 0, 8], sizes = [1, 8, 8], strides = [1, 1, 1]} : vector<1x8x32xf32> to vector<1x8x8xf32>
    %53 = vector.extract_strided_slice %35 {offsets = [0, 0, 8], sizes = [1, 8, 8], strides = [1, 1, 1]} : vector<1x8x32xf32> to vector<1x8x8xf32>
    %54 = vector.extract_strided_slice %36 {offsets = [0, 0, 8], sizes = [1, 8, 8], strides = [1, 1, 1]} : vector<1x8x32xf32> to vector<1x8x8xf32>
    "tpu.trace_start"() <{level = 10 : i32, message = "bnd,bmd->bnm"}> : () -> ()
    %cst_24 = arith.constant dense<0.000000e+00> : vector<1x8x8xf32>
    %55 = tpu.matmul %52, %53, %cst_24 {dimension_numbers = #tpu.dot_dimension_numbers<[2], [2], [1], [1], [0, 0, 0, 1, 1, 1], [0], [0]>} : vector<1x8x8xf32>, vector<1x8x8xf32>, vector<1x8x8xf32> -> vector<1x8x8xf32>
    "tpu.trace_stop"() : () -> ()
    %cst_25 = arith.constant dense<0xFF800000> : vector<1x8xf32>
    %56 = vector.multi_reduction <maximumf>, %55, %cst_25 [2] : vector<1x8x8xf32> to vector<1x8xf32>
    %57 = vector.shape_cast %56 : vector<1x8xf32> to vector<1x8x1xf32>
    %58 = vector.broadcast %57 : vector<1x8x1xf32> to vector<1x8x8xf32>
    %59 = arith.subf %55, %58 : vector<1x8x8xf32>
    %60 = math.exp %59 : vector<1x8x8xf32>
    %cst_26 = arith.constant dense<0.000000e+00> : vector<1x8xf32>
    %61 = vector.multi_reduction <add>, %60, %cst_26 [2] : vector<1x8x8xf32> to vector<1x8xf32>
    %62 = vector.shape_cast %61 : vector<1x8xf32> to vector<1x8x1xf32>
    %63 = tpu.reciprocal %62 {approx = true} : vector<1x8x1xf32> -> vector<1x8x1xf32>
    %64 = vector.broadcast %63 : vector<1x8x1xf32> to vector<1x8x8xf32>
    %65 = arith.mulf %60, %64 : vector<1x8x8xf32>
    "tpu.trace_start"() <{level = 10 : i32, message = "bnm,bmd->bnd"}> : () -> ()
    %cst_27 = arith.constant dense<0.000000e+00> : vector<1x8x8xf32>
    %66 = tpu.matmul %65, %54, %cst_27 {dimension_numbers = #tpu.dot_dimension_numbers<[2], [1], [1], [2], [0, 0, 0, 1, 1, 2], [0], [0]>} : vector<1x8x8xf32>, vector<1x8x8xf32>, vector<1x8x8xf32> -> vector<1x8x8xf32>
    "tpu.trace_stop"() : () -> ()
    %67 = vector.extract_strided_slice %34 {offsets = [0, 0, 16], sizes = [1, 8, 8], strides = [1, 1, 1]} : vector<1x8x32xf32> to vector<1x8x8xf32>
    %68 = vector.extract_strided_slice %35 {offsets = [0, 0, 16], sizes = [1, 8, 8], strides = [1, 1, 1]} : vector<1x8x32xf32> to vector<1x8x8xf32>
    %69 = vector.extract_strided_slice %36 {offsets = [0, 0, 16], sizes = [1, 8, 8], strides = [1, 1, 1]} : vector<1x8x32xf32> to vector<1x8x8xf32>
    "tpu.trace_start"() <{level = 10 : i32, message = "bnd,bmd->bnm"}> : () -> ()
    %cst_28 = arith.constant dense<0.000000e+00> : vector<1x8x8xf32>
    %70 = tpu.matmul %67, %68, %cst_28 {dimension_numbers = #tpu.dot_dimension_numbers<[2], [2], [1], [1], [0, 0, 0, 1, 1, 1], [0], [0]>} : vector<1x8x8xf32>, vector<1x8x8xf32>, vector<1x8x8xf32> -> vector<1x8x8xf32>
    "tpu.trace_stop"() : () -> ()
    %cst_29 = arith.constant dense<0xFF800000> : vector<1x8xf32>
    %71 = vector.multi_reduction <maximumf>, %70, %cst_29 [2] : vector<1x8x8xf32> to vector<1x8xf32>
    %72 = vector.shape_cast %71 : vector<1x8xf32> to vector<1x8x1xf32>
    %73 = vector.broadcast %72 : vector<1x8x1xf32> to vector<1x8x8xf32>
    %74 = arith.subf %70, %73 : vector<1x8x8xf32>
    %75 = math.exp %74 : vector<1x8x8xf32>
    %cst_30 = arith.constant dense<0.000000e+00> : vector<1x8xf32>
    %76 = vector.multi_reduction <add>, %75, %cst_30 [2] : vector<1x8x8xf32> to vector<1x8xf32>
    %77 = vector.shape_cast %76 : vector<1x8xf32> to vector<1x8x1xf32>
    %78 = tpu.reciprocal %77 {approx = true} : vector<1x8x1xf32> -> vector<1x8x1xf32>
    %79 = vector.broadcast %78 : vector<1x8x1xf32> to vector<1x8x8xf32>
    %80 = arith.mulf %75, %79 : vector<1x8x8xf32>
    "tpu.trace_start"() <{level = 10 : i32, message = "bnm,bmd->bnd"}> : () -> ()
    %cst_31 = arith.constant dense<0.000000e+00> : vector<1x8x8xf32>
    %81 = tpu.matmul %80, %69, %cst_31 {dimension_numbers = #tpu.dot_dimension_numbers<[2], [1], [1], [2], [0, 0, 0, 1, 1, 2], [0], [0]>} : vector<1x8x8xf32>, vector<1x8x8xf32>, vector<1x8x8xf32> -> vector<1x8x8xf32>
    "tpu.trace_stop"() : () -> ()
    %82 = vector.extract_strided_slice %34 {offsets = [0, 0, 24], sizes = [1, 8, 8], strides = [1, 1, 1]} : vector<1x8x32xf32> to vector<1x8x8xf32>
    %83 = vector.extract_strided_slice %35 {offsets = [0, 0, 24], sizes = [1, 8, 8], strides = [1, 1, 1]} : vector<1x8x32xf32> to vector<1x8x8xf32>
    %84 = vector.extract_strided_slice %36 {offsets = [0, 0, 24], sizes = [1, 8, 8], strides = [1, 1, 1]} : vector<1x8x32xf32> to vector<1x8x8xf32>
    "tpu.trace_start"() <{level = 10 : i32, message = "bnd,bmd->bnm"}> : () -> ()
    %cst_32 = arith.constant dense<0.000000e+00> : vector<1x8x8xf32>
    %85 = tpu.matmul %82, %83, %cst_32 {dimension_numbers = #tpu.dot_dimension_numbers<[2], [2], [1], [1], [0, 0, 0, 1, 1, 1], [0], [0]>} : vector<1x8x8xf32>, vector<1x8x8xf32>, vector<1x8x8xf32> -> vector<1x8x8xf32>
    "tpu.trace_stop"() : () -> ()
    %cst_33 = arith.constant dense<0xFF800000> : vector<1x8xf32>
    %86 = vector.multi_reduction <maximumf>, %85, %cst_33 [2] : vector<1x8x8xf32> to vector<1x8xf32>
    %87 = vector.shape_cast %86 : vector<1x8xf32> to vector<1x8x1xf32>
    %88 = vector.broadcast %87 : vector<1x8x1xf32> to vector<1x8x8xf32>
    %89 = arith.subf %85, %88 : vector<1x8x8xf32>
    %90 = math.exp %89 : vector<1x8x8xf32>
    %cst_34 = arith.constant dense<0.000000e+00> : vector<1x8xf32>
    %91 = vector.multi_reduction <add>, %90, %cst_34 [2] : vector<1x8x8xf32> to vector<1x8xf32>
    %92 = vector.shape_cast %91 : vector<1x8xf32> to vector<1x8x1xf32>
    %93 = tpu.reciprocal %92 {approx = true} : vector<1x8x1xf32> -> vector<1x8x1xf32>
    %94 = vector.broadcast %93 : vector<1x8x1xf32> to vector<1x8x8xf32>
    %95 = arith.mulf %90, %94 : vector<1x8x8xf32>
    "tpu.trace_start"() <{level = 10 : i32, message = "bnm,bmd->bnd"}> : () -> ()
    %cst_35 = arith.constant dense<0.000000e+00> : vector<1x8x8xf32>
    %96 = tpu.matmul %95, %84, %cst_35 {dimension_numbers = #tpu.dot_dimension_numbers<[2], [1], [1], [2], [0, 0, 0, 1, 1, 2], [0], [0]>} : vector<1x8x8xf32>, vector<1x8x8xf32>, vector<1x8x8xf32> -> vector<1x8x8xf32>
    "tpu.trace_stop"() : () -> ()
    %97 = tpu.concatenate %51, %66, %81, %96 in 2 : vector<1x8x8xf32>, vector<1x8x8xf32>, vector<1x8x8xf32>, vector<1x8x8xf32> -> vector<1x8x32xf32>
    %98 = vector.shape_cast %97 : vector<1x8x32xf32> to vector<8x32xf32>
    %c0_36 = arith.constant 0 : index
    %c0_37 = arith.constant 0 : index
    %99 = vector.load %arg7[%c0_36, %c0_37] : memref<32x32xf32, #tpu.memory_space<vmem>>, vector<32x32xf32>
    %cst_38 = arith.constant dense<0.000000e+00> : vector<8x32xf32>
    %100 = tpu.matmul %98, %99, %cst_38 {dimension_numbers = #tpu.dot_dimension_numbers<[1], [0], [0], [1], [0, 0, 1, 1], [], []>} : vector<8x32xf32>, vector<32x32xf32>, vector<8x32xf32> -> vector<8x32xf32>
    %c0_39 = arith.constant 0 : index
    %c0_40 = arith.constant 0 : index
    %101 = vector.load %arg8[%c0_39, %c0_40] : memref<1x32xf32, #tpu.memory_space<vmem>>, vector<1x32xf32>
    %102 = vector.broadcast %101 : vector<1x32xf32> to vector<8x32xf32>
    %103 = arith.addf %100, %102 : vector<8x32xf32>
    %104 = vector.shape_cast %103 : vector<8x32xf32> to vector<1x8x32xf32>
    %c0_41 = arith.constant 0 : index
    %c0_42 = arith.constant 0 : index
    %c0_43 = arith.constant 0 : index
    %105 = vector.load %arg9[%c0_41, %c0_42, %c0_43] : memref<1x8x32xf32, #tpu.memory_space<vmem>>, vector<1x8x32xf32>
    tpu.vector_store %arg9[%c0_41, %c0_42, %c0_43], %104 {strides = array<i32>} : memref<1x8x32xf32, #tpu.memory_space<vmem>>, vector<1x8x32xf32>,
    return
  }
  func.func @transform_0(%arg0: i32) -> (i32, i32, i32) {
    %c0_i32 = arith.constant 0 : i32
    %c0_i32_0 = arith.constant 0 : i32
    %c0_i32_1 = arith.constant 0 : i32
    return %arg0, %c0_i32, %c0_i32_0 : i32, i32, i32
  }
  func.func @transform_1(%arg0: i32) -> (i32, i32) {
    %c0_i32 = arith.constant 0 : i32
    %c0_i32_0 = arith.constant 0 : i32
    %c0_i32_1 = arith.constant 0 : i32
    return %c0_i32, %c0_i32_0 : i32, i32
  }
  func.func @transform_2(%arg0: i32) -> (i32, i32) {
    %c0_i32 = arith.constant 0 : i32
    %c0_i32_0 = arith.constant 0 : i32
    %c0_i32_1 = arith.constant 0 : i32
    return %c0_i32, %c0_i32_0 : i32, i32
  }
  func.func @transform_3(%arg0: i32) -> (i32, i32) {
    %c0_i32 = arith.constant 0 : i32
    %c0_i32_0 = arith.constant 0 : i32
    %c0_i32_1 = arith.constant 0 : i32
    return %c0_i32, %c0_i32_0 : i32, i32
  }
  func.func @transform_4(%arg0: i32) -> (i32, i32) {
    %c0_i32 = arith.constant 0 : i32
    %c0_i32_0 = arith.constant 0 : i32
    %c0_i32_1 = arith.constant 0 : i32
    return %c0_i32, %c0_i32_0 : i32, i32
  }
  func.func @transform_5(%arg0: i32) -> (i32, i32) {
    %c0_i32 = arith.constant 0 : i32
    %c0_i32_0 = arith.constant 0 : i32
    %c0_i32_1 = arith.constant 0 : i32
    return %c0_i32, %c0_i32_0 : i32, i32
  }
  func.func @transform_6(%arg0: i32) -> (i32, i32) {
    %c0_i32 = arith.constant 0 : i32
    %c0_i32_0 = arith.constant 0 : i32
    %c0_i32_1 = arith.constant 0 : i32
    return %c0_i32, %c0_i32_0 : i32, i32
  }
  func.func @transform_7(%arg0: i32) -> (i32, i32) {
    %c0_i32 = arith.constant 0 : i32
    %c0_i32_0 = arith.constant 0 : i32
    %c0_i32_1 = arith.constant 0 : i32
    return %c0_i32, %c0_i32_0 : i32, i32
  }
  func.func @transform_8(%arg0: i32) -> (i32, i32, i32) {
    %c0_i32 = arith.constant 0 : i32
    %c0_i32_0 = arith.constant 0 : i32
    %c0_i32_1 = arith.constant 0 : i32
    return %arg0, %c0_i32, %c0_i32_0 : i32, i32, i32
  }
}

</mosaic_0001>

<llo_original>
// kernel: tpu_custom_call.1
$region0: #{tpu_custom_call.1}
  #allocation0 [shape = 'u32[]', space=smem, size = 0x4, offset = 0x4, fixed_abs, tag = 'smem constant byte address 0x4 - core index']
  #allocation1 [shape = 'u32[144,128]{1,0:T(1,128)}', space=vmem, size = 0x12000, scoped, tag = 'internal scratch']
  %s0 = inlined_call_operand.hbm [shape: f32[2,8,32], index: 0, kind: input, shape index: {}]
  %s1 = inlined_call_operand.hbm [shape: f32[1,32], index: 1, kind: input, shape index: {}]
  %s2 = inlined_call_operand.hbm [shape: f32[1,32], index: 2, kind: input, shape index: {}]
  %s3 = inlined_call_operand.hbm [shape: f32[32,32], index: 3, kind: input, shape index: {}]
  %s4 = inlined_call_operand.hbm [shape: f32[32,32], index: 4, kind: input, shape index: {}]
  %s5 = inlined_call_operand.hbm [shape: f32[32,32], index: 5, kind: input, shape index: {}]
  %s6 = inlined_call_operand.hbm [shape: f32[32,32], index: 6, kind: input, shape index: {}]
  %s7 = inlined_call_operand.hbm [shape: f32[1,32], index: 7, kind: input, shape index: {}]
  %s8 = inlined_call_operand.hbm [shape: f32[2,8,32], index: 8, kind: output, shape index: {}]
  %s9 = sld [smem:[#allocation0]]
  $region97: #{tpu_custom_call.1} parent=0
    _
  %s11 = ssub.s32 1, %s9
  %s12 = scalar_select 0, %s11, %s9
  $region1: #{tpu_custom_call.1} parent=0
    #allocation2 [shape = 'u8[8192]{0}', space=vmem, size = 0x2000, scoped, tag = 'input window, operand 0']
    #allocation3 [shape = 's32[2]{0}', space=sflag, size = 0x8, scoped, tag = 'scoped memory for tpu_custom_call.1']
    #allocation4 [shape = 's32[2]{0}', space=sflag, size = 0x8, scoped, tag = 'scoped memory for tpu_custom_call.1']
    #allocation5 [shape = 'u8[512]{0}', space=vmem, size = 0x400, scoped, tag = 'input window, operand 1, single buffered']
    #allocation6 [shape = 's32[1]{0}', space=sflag, size = 0x4, scoped, tag = 'scoped memory for tpu_custom_call.1']
    #allocation7 [shape = 'u8[512]{0}', space=vmem, size = 0x400, scoped, tag = 'input window, operand 2, single buffered']
    #allocation8 [shape = 'u8[16384]{0}', space=vmem, size = 0x4000, scoped, tag = 'input window, operand 3, single buffered']
    #allocation9 [shape = 's32[1]{0}', space=sflag, size = 0x4, scoped, tag = 'scoped memory for tpu_custom_call.1']
    #allocation10 [shape = 'u8[16384]{0}', space=vmem, size = 0x4000, scoped, tag = 'input window, operand 4, single buffered']
    #allocation11 [shape = 'u8[16384]{0}', space=vmem, size = 0x4000, scoped, tag = 'input window, operand 5, single buffered']
    #allocation12 [shape = 's32[1]{0}', space=sflag, size = 0x4, scoped, tag = 'scoped memory for tpu_custom_call.1']
    #allocation13 [shape = 'u8[16384]{0}', space=vmem, size = 0x4000, scoped, tag = 'input window, operand 6, single buffered']
    #allocation14 [shape = 'u8[512]{0}', space=vmem, size = 0x400, scoped, tag = 'input window, operand 7, single buffered']
    #allocation15 [shape = 's32[1]{0}', space=sflag, size = 0x4, scoped, tag = 'scoped memory for tpu_custom_call.1']
    #allocation16 [shape = 'u8[8192]{0}', space=vmem, size = 0x2000, scoped, tag = 'output window, operand 0']
    %13 = vsyncpa [#allocation3], 0
    %s14 = scalar_lea.sflag [#allocation3], 1
    %15 = vsyncpa %s14, 0
    %16 = vsyncpa [#allocation6], 0
    %17 = vsyncpa [#allocation9], 0
    %18 = vsyncpa [#allocation12], 0
    %19 = vsyncpa [#allocation15], 0
    %20 = vsyncpa [#allocation4], 0
    %s21 = scalar_lea.sflag [#allocation4], 1
    %22 = vsyncpa %s21, 0
    loop: start=0, step=1, limit=4
    $region2: #{tpu_custom_call.1} parent=1 // loop_pre_header
      _
    $region3: #{tpu_custom_call.1} parent=1 // loop_header
      %s24 = sphi 0, %s28
      %p25 = scmp.ge.s32.totalorder %s24, 4
      %s34 = sphi 0, %s36
      %s37 = sphi 0, %s34
      %s38 = sphi 0, %s37
      %s54 = sphi 0, %s38
      %s58 = sphi 0, %s58
      %s60 = sphi 0, %s58
      %s61 = sphi 0, %s60
      %s75 = sphi 0, %s61
      %s79 = sphi 0, %s79
      %s81 = sphi 0, %s79
      %s82 = sphi 0, %s81
      %s96 = sphi 0, %s82
      %s100 = sphi 0, %s100
      %s102 = sphi 0, %s100
      %s103 = sphi 0, %s102
      %s117 = sphi 0, %s103
      %s121 = sphi 0, %s121
      %s123 = sphi 0, %s121
      %s124 = sphi 0, %s123
      %s138 = sphi 0, %s124
      %s142 = sphi 0, %s142
      %s144 = sphi 0, %s142
      %s145 = sphi 0, %s144
      %s159 = sphi 0, %s145
      %s163 = sphi 0, %s163
      %s165 = sphi 0, %s163
      %s166 = sphi 0, %s165
      %s180 = sphi 0, %s166
      %s184 = sphi 0, %s184
      %s186 = sphi 0, %s184
      %s187 = sphi 0, %s186
      %s201 = sphi 0, %s187
      %s207 = sphi 0, %s209
      %s210 = sphi 0, %s207
      %s211 = sphi 0, %s210
      %s227 = sphi 0, %s211
    $region4: #{tpu_custom_call.1} parent=1 // loop_header_branch
      %27 = sbr.rel (%p25) target = $region8
    $region5: #{tpu_custom_call.1} parent=1 // loop_body
      %s29 = ssub.s32 %s24, 1
      %s30 = ssub.s32 %s24, 2
      %s31 = sadd.s32 %s24, 1
      %s32 = ssub.s32 %s24, %s31
      %p33 = scmp.eq.s32.totalorder %s32, 0
      %s35 = sadd.s32 %s34, 1
      %s36 = scalar_select %p33, %s34, %s35
      %p39 = pneg %p33
      %p40 = scmp.eq.s32.totalorder %s24, 1
      %p41 = por %p39, %p40
      %p42 = scmp.ne.s32.totalorder %s34, %s37
      %p43 = scmp.eq.s32.totalorder %s24, 0
      %p44 = por %p42, %p43
      %p45 = scmp.ne.s32.totalorder %s34, %s37
      %p46 = scmp.eq.s32.totalorder %s29, 1
      %p47 = por %p45, %p46
      %p48 = scmp.ne.s32.totalorder %s37, %s38
      %p49 = scmp.eq.s32.totalorder %s29, 0
      %p50 = por %p48, %p49
      %p51 = scmp.ne.s32.totalorder %s37, %s38
      %p52 = scmp.eq.s32.totalorder %s30, 1
      %p53 = por %p51, %p52
      %p55 = scmp.ne.s32.totalorder %s38, %s54
      %p56 = scmp.eq.s32.totalorder %s30, 0
      %p57 = por %p55, %p56
      %s59 = sadd.s32 %s58, 1
      %p62 = scmp.eq.s32.totalorder %s24, 1
      %p63 = scmp.ne.s32.totalorder %s58, %s60
      %p64 = scmp.eq.s32.totalorder %s24, 0
      %p65 = por %p63, %p64
      %p66 = scmp.ne.s32.totalorder %s58, %s60
      %p67 = scmp.eq.s32.totalorder %s29, 1
      %p68 = por %p66, %p67
      %p69 = scmp.ne.s32.totalorder %s60, %s61
      %p70 = scmp.eq.s32.totalorder %s29, 0
      %p71 = por %p69, %p70
      %p72 = scmp.ne.s32.totalorder %s60, %s61
      %p73 = scmp.eq.s32.totalorder %s30, 1
      %p74 = por %p72, %p73
      %p76 = scmp.ne.s32.totalorder %s61, %s75
      %p77 = scmp.eq.s32.totalorder %s30, 0
      %p78 = por %p76, %p77
      %s80 = sadd.s32 %s79, 1
      %p83 = scmp.eq.s32.totalorder %s24, 1
      %p84 = scmp.ne.s32.totalorder %s79, %s81
      %p85 = scmp.eq.s32.totalorder %s24, 0
      %p86 = por %p84, %p85
      %p87 = scmp.ne.s32.totalorder %s79, %s81
      %p88 = scmp.eq.s32.totalorder %s29, 1
      %p89 = por %p87, %p88
      %p90 = scmp.ne.s32.totalorder %s81, %s82
      %p91 = scmp.eq.s32.totalorder %s29, 0
      %p92 = por %p90, %p91
      %p93 = scmp.ne.s32.totalorder %s81, %s82
      %p94 = scmp.eq.s32.totalorder %s30, 1
      %p95 = por %p93, %p94
      %p97 = scmp.ne.s32.totalorder %s82, %s96
      %p98 = scmp.eq.s32.totalorder %s30, 0
      %p99 = por %p97, %p98
      %s101 = sadd.s32 %s100, 1
      %p104 = scmp.eq.s32.totalorder %s24, 1
      %p105 = scmp.ne.s32.totalorder %s100, %s102
      %p106 = scmp.eq.s32.totalorder %s24, 0
      %p107 = por %p105, %p106
      %p108 = scmp.ne.s32.totalorder %s100, %s102
      %p109 = scmp.eq.s32.totalorder %s29, 1
      %p110 = por %p108, %p109
      %p111 = scmp.ne.s32.totalorder %s102, %s103
      %p112 = scmp.eq.s32.totalorder %s29, 0
      %p113 = por %p111, %p112
      %p114 = scmp.ne.s32.totalorder %s102, %s103
      %p115 = scmp.eq.s32.totalorder %s30, 1
      %p116 = por %p114, %p115
      %p118 = scmp.ne.s32.totalorder %s103, %s117
      %p119 = scmp.eq.s32.totalorder %s30, 0
      %p120 = por %p118, %p119
      %s122 = sadd.s32 %s121, 1
      %p125 = scmp.eq.s32.totalorder %s24, 1
      %p126 = scmp.ne.s32.totalorder %s121, %s123
      %p127 = scmp.eq.s32.totalorder %s24, 0
      %p128 = por %p126, %p127
      %p129 = scmp.ne.s32.totalorder %s121, %s123
      %p130 = scmp.eq.s32.totalorder %s29, 1
      %p131 = por %p129, %p130
      %p132 = scmp.ne.s32.totalorder %s123, %s124
      %p133 = scmp.eq.s32.totalorder %s29, 0
      %p134 = por %p132, %p133
      %p135 = scmp.ne.s32.totalorder %s123, %s124
      %p136 = scmp.eq.s32.totalorder %s30, 1
      %p137 = por %p135, %p136
      %p139 = scmp.ne.s32.totalorder %s124, %s138
      %p140 = scmp.eq.s32.totalorder %s30, 0
      %p141 = por %p139, %p140
      %s143 = sadd.s32 %s142, 1
      %p146 = scmp.eq.s32.totalorder %s24, 1
      %p147 = scmp.ne.s32.totalorder %s142, %s144
      %p148 = scmp.eq.s32.totalorder %s24, 0
      %p149 = por %p147, %p148
      %p150 = scmp.ne.s32.totalorder %s142, %s144
      %p151 = scmp.eq.s32.totalorder %s29, 1
      %p152 = por %p150, %p151
      %p153 = scmp.ne.s32.totalorder %s144, %s145
      %p154 = scmp.eq.s32.totalorder %s29, 0
      %p155 = por %p153, %p154
      %p156 = scmp.ne.s32.totalorder %s144, %s145
      %p157 = scmp.eq.s32.totalorder %s30, 1
      %p158 = por %p156, %p157
      %p160 = scmp.ne.s32.totalorder %s145, %s159
      %p161 = scmp.eq.s32.totalorder %s30, 0
      %p162 = por %p160, %p161
      %s164 = sadd.s32 %s163, 1
      %p167 = scmp.eq.s32.totalorder %s24, 1
      %p168 = scmp.ne.s32.totalorder %s163, %s165
      %p169 = scmp.eq.s32.totalorder %s24, 0
      %p170 = por %p168, %p169
      %p171 = scmp.ne.s32.totalorder %s163, %s165
      %p172 = scmp.eq.s32.totalorder %s29, 1
      %p173 = por %p171, %p172
      %p174 = scmp.ne.s32.totalorder %s165, %s166
      %p175 = scmp.eq.s32.totalorder %s29, 0
      %p176 = por %p174, %p175
      %p177 = scmp.ne.s32.totalorder %s165, %s166
      %p178 = scmp.eq.s32.totalorder %s30, 1
      %p179 = por %p177, %p178
      %p181 = scmp.ne.s32.totalorder %s166, %s180
      %p182 = scmp.eq.s32.totalorder %s30, 0
      %p183 = por %p181, %p182
      %s185 = sadd.s32 %s184, 1
      %p188 = scmp.eq.s32.totalorder %s24, 1
      %p189 = scmp.ne.s32.totalorder %s184, %s186
      %p190 = scmp.eq.s32.totalorder %s24, 0
      %p191 = por %p189, %p190
      %p192 = scmp.ne.s32.totalorder %s184, %s186
      %p193 = scmp.eq.s32.totalorder %s29, 1
      %p194 = por %p192, %p193
      %p195 = scmp.ne.s32.totalorder %s186, %s187
      %p196 = scmp.eq.s32.totalorder %s29, 0
      %p197 = por %p195, %p196
      %p198 = scmp.ne.s32.totalorder %s186, %s187
      %p199 = scmp.eq.s32.totalorder %s30, 1
      %p200 = por %p198, %p199
      %p202 = scmp.ne.s32.totalorder %s187, %s201
      %p203 = scmp.eq.s32.totalorder %s30, 0
      %p204 = por %p202, %p203
      %s205 = ssub.s32 %s24, %s31
      %p206 = scmp.eq.s32.totalorder %s205, 0
      %s208 = sadd.s32 %s207, 1
      %s209 = scalar_select %p206, %s207, %s208
      %p212 = pneg %p206
      %p213 = scmp.eq.s32.totalorder %s24, 1
      %p214 = por %p212, %p213
      %p215 = scmp.ne.s32.totalorder %s207, %s210
      %p216 = scmp.eq.s32.totalorder %s24, 0
      %p217 = por %p215, %p216
      %p218 = scmp.ne.s32.totalorder %s207, %s210
      %p219 = scmp.eq.s32.totalorder %s29, 1
      %p220 = por %p218, %p219
      %p221 = scmp.ne.s32.totalorder %s210, %s211
      %p222 = scmp.eq.s32.totalorder %s29, 0
      %p223 = por %p221, %p222
      %p224 = scmp.ne.s32.totalorder %s210, %s211
      %p225 = scmp.eq.s32.totalorder %s30, 1
      %p226 = por %p224, %p225
      %p228 = scmp.ne.s32.totalorder %s211, %s227
      %p229 = scmp.eq.s32.totalorder %s30, 0
      %p230 = por %p228, %p229
      %p231 = scmp.le.s32.totalorder 1, %s24
      %p232 = scmp.lt.s32.totalorder %s24, 3
      %p233 = pnand %p231, %p232
      %p234 = pneg %p233
      // Predicated region
      $region9: #{tpu_custom_call.1} parent=5 // pred_check
        _
      $region10: #{tpu_custom_call.1} parent=5 // pred_check_branch
        %236 = sbr.rel (%p233) target = $region12
      $region11: #{tpu_custom_call.1} parent=5 // pred_region
        %s237 = ssub.s32 %s24, 1
        // Predicated region
        $region13: #{tpu_custom_call.1} parent=11 // pred_check
          %p238 = pneg %p71
        $region14: #{tpu_custom_call.1} parent=11 // pred_check_branch
          %240 = sbr.rel (%p238) target = $region16
        $region15: #{tpu_custom_call.1} parent=11 // pred_region
          %s242 = ssub.s32 16, 16
          %243 = vsyncadd [#allocation6], %s242
          %s245 = sshll.u32 [#allocation5], 4
          %s246 = int_to_ptr.vmem [resolvable:$true] %s245
          %248 = dma.hbm_to_vmem [thread:$0]  %s1, 16, %s246, [#allocation6]
        $region16: #{tpu_custom_call.1} parent=11 // pred_fallthru
          _
        // Predicated region
        $region17: #{tpu_custom_call.1} parent=11 // pred_check
          %p249 = pneg %p92
        $region18: #{tpu_custom_call.1} parent=11 // pred_check_branch
          %251 = sbr.rel (%p249) target = $region20
        $region19: #{tpu_custom_call.1} parent=11 // pred_region
          %s253 = ssub.s32 16, 16
          %254 = vsyncadd [#allocation6], %s253
          %s256 = sshll.u32 [#allocation7], 4
          %s257 = int_to_ptr.vmem [resolvable:$true] %s256
          %259 = dma.hbm_to_vmem [thread:$0]  %s2, 16, %s257, [#allocation6]
        $region20: #{tpu_custom_call.1} parent=11 // pred_fallthru
          _
        // Predicated region
        $region21: #{tpu_custom_call.1} parent=11 // pred_check
          %p260 = pneg %p113
        $region22: #{tpu_custom_call.1} parent=11 // pred_check_branch
          %262 = sbr.rel (%p260) target = $region24
        $region23: #{tpu_custom_call.1} parent=11 // pred_region
          %s264 = ssub.s32 512, 512
          %265 = vsyncadd [#allocation9], %s264
          %s266 = sshll.u32 [#allocation8], 4
          %s267 = int_to_ptr.vmem [resolvable:$true] %s266
          %272 = dma.hbm_to_vmem [thread:$0]  %s3, 512, %s267, [#allocation9], 128, 128, 8
        $region24: #{tpu_custom_call.1} parent=11 // pred_fallthru
          _
        // Predicated region
        $region25: #{tpu_custom_call.1} parent=11 // pred_check
          %p273 = pneg %p134
        $region26: #{tpu_custom_call.1} parent=11 // pred_check_branch
          %275 = sbr.rel (%p273) target = $region28
        $region27: #{tpu_custom_call.1} parent=11 // pred_region
          %s277 = ssub.s32 512, 512
          %278 = vsyncadd [#allocation9], %s277
          %s279 = sshll.u32 [#allocation10], 4
          %s280 = int_to_ptr.vmem [resolvable:$true] %s279
          %285 = dma.hbm_to_vmem [thread:$0]  %s4, 512, %s280, [#allocation9], 128, 128, 8
        $region28: #{tpu_custom_call.1} parent=11 // pred_fallthru
          _
        // Predicated region
        $region29: #{tpu_custom_call.1} parent=11 // pred_check
          %p286 = pneg %p155
        $region30: #{tpu_custom_call.1} parent=11 // pred_check_branch
          %288 = sbr.rel (%p286) target = $region32
        $region31: #{tpu_custom_call.1} parent=11 // pred_region
          %s290 = ssub.s32 512, 512
          %291 = vsyncadd [#allocation12], %s290
          %s292 = sshll.u32 [#allocation11], 4
          %s293 = int_to_ptr.vmem [resolvable:$true] %s292
          %298 = dma.hbm_to_vmem [thread:$0]  %s5, 512, %s293, [#allocation12], 128, 128, 8
        $region32: #{tpu_custom_call.1} parent=11 // pred_fallthru
          _
        // Predicated region
        $region33: #{tpu_custom_call.1} parent=11 // pred_check
          %p299 = pneg %p176
        $region34: #{tpu_custom_call.1} parent=11 // pred_check_branch
          %301 = sbr.rel (%p299) target = $region36
        $region35: #{tpu_custom_call.1} parent=11 // pred_region
          %s303 = ssub.s32 512, 512
          %304 = vsyncadd [#allocation12], %s303
          %s305 = sshll.u32 [#allocation13], 4
          %s306 = int_to_ptr.vmem [resolvable:$true] %s305
          %311 = dma.hbm_to_vmem [thread:$0]  %s6, 512, %s306, [#allocation12], 128, 128, 8
        $region36: #{tpu_custom_call.1} parent=11 // pred_fallthru
          _
        // Predicated region
        $region37: #{tpu_custom_call.1} parent=11 // pred_check
          %p312 = pneg %p197
        $region38: #{tpu_custom_call.1} parent=11 // pred_check_branch
          %314 = sbr.rel (%p312) target = $region40
        $region39: #{tpu_custom_call.1} parent=11 // pred_region
          %s316 = ssub.s32 16, 16
          %317 = vsyncadd [#allocation15], %s316
          %s319 = sshll.u32 [#allocation14], 4
          %s320 = int_to_ptr.vmem [resolvable:$true] %s319
          %322 = dma.hbm_to_vmem [thread:$0]  %s7, 16, %s320, [#allocation15]
        $region40: #{tpu_custom_call.1} parent=11 // pred_fallthru
          _
      $region12: #{tpu_custom_call.1} parent=5 // pred_fallthru
        _
      %p323 = scmp.lt.s32.totalorder %s24, 2
      // Predicated region
      $region41: #{tpu_custom_call.1} parent=5 // pred_check
        %p324 = pneg %p323
      $region42: #{tpu_custom_call.1} parent=5 // pred_check_branch
        %326 = sbr.rel (%p324) target = $region44
      $region43: #{tpu_custom_call.1} parent=5 // pred_region
        // Predicated region
        $region45: #{tpu_custom_call.1} parent=43 // pred_check
          %p327 = pneg %p44
        $region46: #{tpu_custom_call.1} parent=43 // pred_check_branch
          %329 = sbr.rel (%p327) target = $region48
        $region47: #{tpu_custom_call.1} parent=43 // pred_region
          %s330 = sand.u32 %s34, 1
          %s331 = scalar_lea.sflag [#allocation3], %s330
          %s332 = sand.u32 %s34, 1
          %s333 = smul.addr %s332, 8
          %s334 = scalar_lea.vmem [#allocation2], %s333
          %s336 = ssub.s32 128, 128
          %337 = vsyncadd %s331, %s336
          %s338 = smul.addr %s24, 128
          %s339 = scalar_lea.hbm %s0, %s338
          %s341 = sshll.u32 %s334, 4
          %s342 = int_to_ptr.vmem [resolvable:$true] %s341
          %344 = dma.hbm_to_vmem [thread:$0]  %s339, 128, %s342, %s331
        $region48: #{tpu_custom_call.1} parent=43 // pred_fallthru
          _
      $region44: #{tpu_custom_call.1} parent=5 // pred_fallthru
        _
      %p345 = scmp.le.s32.totalorder 1, %s24
      %p346 = scmp.lt.s32.totalorder %s24, 3
      %p347 = pnand %p345, %p346
      %p348 = pneg %p347
      // Predicated region
      $region49: #{tpu_custom_call.1} parent=5 // pred_check
        _
      $region50: #{tpu_custom_call.1} parent=5 // pred_check_branch
        %350 = sbr.rel (%p347) target = $region52
      $region51: #{tpu_custom_call.1} parent=5 // pred_region
        %s351 = ssub.s32 %s24, 1
        %s352 = sand.u32 %s37, 1
        %s353 = scalar_lea.sflag [#allocation3], %s352
        %s354 = sand.u32 %s37, 1
        %s355 = smul.addr %s354, 8
        %s356 = scalar_lea.vmem [#allocation2], %s355
        // Predicated region
        $region53: #{tpu_custom_call.1} parent=51 // pred_check
          %p357 = pneg %p50
        $region54: #{tpu_custom_call.1} parent=51 // pred_check_branch
          %359 = sbr.rel (%p357) target = $region56
        $region55: #{tpu_custom_call.1} parent=51 // pred_region
          %360 = dma.done %s353, 128
        $region56: #{tpu_custom_call.1} parent=51 // pred_fallthru
          _
        // Predicated region
        $region57: #{tpu_custom_call.1} parent=51 // pred_check
          %p361 = pneg %p71
        $region58: #{tpu_custom_call.1} parent=51 // pred_check_branch
          %363 = sbr.rel (%p361) target = $region60
        $region59: #{tpu_custom_call.1} parent=51 // pred_region
          %364 = dma.done [#allocation6], 16
        $region60: #{tpu_custom_call.1} parent=51 // pred_fallthru
          _
        // Predicated region
        $region61: #{tpu_custom_call.1} parent=51 // pred_check
          %p365 = pneg %p92
        $region62: #{tpu_custom_call.1} parent=51 // pred_check_branch
          %367 = sbr.rel (%p365) target = $region64
        $region63: #{tpu_custom_call.1} parent=51 // pred_region
          %368 = dma.done [#allocation6], 16
        $region64: #{tpu_custom_call.1} parent=51 // pred_fallthru
          _
        // Predicated region
        $region65: #{tpu_custom_call.1} parent=51 // pred_check
          %p369 = pneg %p113
        $region66: #{tpu_custom_call.1} parent=51 // pred_check_branch
          %371 = sbr.rel (%p369) target = $region68
        $region67: #{tpu_custom_call.1} parent=51 // pred_region
          %372 = dma.done [#allocation9], 512
        $region68: #{tpu_custom_call.1} parent=51 // pred_fallthru
          _
        // Predicated region
        $region69: #{tpu_custom_call.1} parent=51 // pred_check
          %p373 = pneg %p134
        $region70: #{tpu_custom_call.1} parent=51 // pred_check_branch
          %375 = sbr.rel (%p373) target = $region72
        $region71: #{tpu_custom_call.1} parent=51 // pred_region
          %376 = dma.done [#allocation9], 512
        $region72: #{tpu_custom_call.1} parent=51 // pred_fallthru
          _
        // Predicated region
        $region73: #{tpu_custom_call.1} parent=51 // pred_check
          %p377 = pneg %p155
        $region74: #{tpu_custom_call.1} parent=51 // pred_check_branch
          %379 = sbr.rel (%p377) target = $region76
        $region75: #{tpu_custom_call.1} parent=51 // pred_region
          %380 = dma.done [#allocation12], 512
        $region76: #{tpu_custom_call.1} parent=51 // pred_fallthru
          _
        // Predicated region
        $region77: #{tpu_custom_call.1} parent=51 // pred_check
          %p381 = pneg %p176
        $region78: #{tpu_custom_call.1} parent=51 // pred_check_branch
          %383 = sbr.rel (%p381) target = $region80
        $region79: #{tpu_custom_call.1} parent=51 // pred_region
          %384 = dma.done [#allocation12], 512
        $region80: #{tpu_custom_call.1} parent=51 // pred_fallthru
          _
        // Predicated region
        $region81: #{tpu_custom_call.1} parent=51 // pred_check
          %p385 = pneg %p197
        $region82: #{tpu_custom_call.1} parent=51 // pred_check_branch
          %387 = sbr.rel (%p385) target = $region84
        $region83: #{tpu_custom_call.1} parent=51 // pred_region
          %388 = dma.done [#allocation15], 16
        $region84: #{tpu_custom_call.1} parent=51 // pred_fallthru
          _
        %s389 = sand.u32 %s37, 1
        %s390 = scalar_lea.sflag [#allocation3], %s389
        %s391 = sand.u32 %s37, 1
        %s392 = smul.addr %s391, 8
        %s393 = scalar_lea.vmem [#allocation2], %s392
        %p394 = pneg %p50
        %p395 = pneg %p47
        %p396 = pneg %p71
        %p397 = pneg %p68
        %p398 = pneg %p92
        %p399 = pneg %p89
        %p400 = pneg %p113
        %p401 = pneg %p110
        %p402 = pneg %p134
        %p403 = pneg %p131
        %p404 = pneg %p155
        %p405 = pneg %p152
        %p406 = pneg %p176
        %p407 = pneg %p173
        %p408 = pneg %p197
        %p409 = pneg %p194
        %p410 = pneg %p223
        %p411 = pneg %p220
        %s412 = sand.u32 %s210, 1
        %s413 = scalar_lea.sflag [#allocation4], %s412
        %s414 = sand.u32 %s210, 1
        %s415 = smul.addr %s414, 8
        %s416 = scalar_lea.vmem [#allocation16], %s415
        %v417 = vld [vmem:[%s356] sm:$0xff]
        %vm418 = vcmask 261120
        %v419 = vsel %vm418, %v417, 0.0
        %420 = vadd.xlane.f32.xlu0 %v419
        %v421 = vpop.xlane.xlu0 %420
        %v422 = vrcp.pop 32.0
        %v423 = vmul.f32 %v421, %v422
        %v424 = vsub.f32 %v417, %v423
        %v425 = vmul.f32 %v424, %v424
        %v426 = vsel %vm418, %v425, 0.0
        %427 = vadd.xlane.f32.xlu0 %v426
        %v428 = vpop.xlane.xlu0 %427
        %v429 = vmul.f32 %v428, %v422
        %v430 = vadd.f32 %v429, 1e-05
        %v431 = vrsqrt.pop %v430
        %v432 = vmul.f32 %v424, %v431
        %v433 = vld [vmem:[#allocation5] sm:$0x1]
        %v435 = vlaneseq
        %v436 = vshrl.u32 %v435, 7
        %v437 = vsub.s32 0, %v436
        %v438 = vrot.slane %v433, %v437
        %v440 = vmul.f32 %v432, %v438
        %v441 = vld [vmem:[#allocation7] sm:$0x1]
        %v443 = vlaneseq
        %v444 = vshrl.u32 %v443, 7
        %v445 = vsub.s32 0, %v444
        %v446 = vrot.slane %v441, %v445
        %v448 = vadd.f32 %v440, %v446
        %v449 = vld [vmem:[#allocation8] sm:$0xff]
        %v450 = vld [vmem:[#allocation8 + $0x8] sm:$0xff]
        %v451 = vld [vmem:[#allocation8 + $0x10] sm:$0xff]
        %v452 = vld [vmem:[#allocation8 + $0x18] sm:$0xff]
        %v454 = vsel %vm418, %v448, 0
        %456 = vmatprep.subr.mxu0 0.0
        %457 = vmatpush1.msra.mxu0 %v449
        %458 = vmatprep.subr.mxu0 0.0
        %459 = vmatpush1.msra.mxu0 %v450
        %460 = vmatprep.subr.mxu0 0.0
        %461 = vmatpush1.msra.mxu0 %v451
        %462 = vmatprep.subr.mxu0 0.0
        %463 = vmatpush1.msra.mxu0 %v452
        %464 = vmatprep.subr.mxu0 0.0
        %465 = vmatpush1.msra.mxu0 0.0
        %466 = vmatprep.subr.mxu0 0.0
        %467 = vmatpush1.msra.mxu0 0.0
        %468 = vmatprep.subr.mxu0 0.0
        %469 = vmatpush1.msra.mxu0 0.0
        %470 = vmatprep.subr.mxu0 0.0
        %471 = vmatpush1.msra.mxu0 0.0
        %472 = vmatprep.subr.mxu0 0.0
        %473 = vmatpush1.msra.mxu0 0.0
        %474 = vmatprep.subr.mxu0 0.0
        %475 = vmatpush1.msra.mxu0 0.0
        %476 = vmatprep.subr.mxu0 0.0
        %477 = vmatpush1.msra.mxu0 0.0
        %478 = vmatprep.subr.mxu0 0.0
        %479 = vmatpush1.msra.mxu0 0.0
        %480 = vmatprep.subr.mxu0 0.0
        %481 = vmatpush1.msra.mxu0 0.0
        %482 = vmatprep.subr.mxu0 0.0
        %483 = vmatpush1.msra.mxu0 0.0
        %484 = vmatprep.subr.mxu0 0.0
        %485 = vmatpush1.msra.mxu0 0.0
        %486 = vmatprep.subr.mxu0 0.0
        %487 = vmatpush1.msra.mxu0 0.0
        %488 = vmatprep.subr.mxu0 0.0
        %489 = vmatpush1.msra.mxu0 0.0
        %490 = vmatprep.subr.mxu0 0.0
        %491 = vmatpush1.msra.mxu0 0.0
        %492 = vmatprep.subr.mxu0 0.0
        %493 = vmatpush1.msra.mxu0 0.0
        %494 = vmatprep.subr.mxu0 0.0
        %495 = vmatpush1.msra.mxu0 0.0
        %496 = vmatprep.subr.mxu0 0.0
        %497 = vmatpush1.msra.mxu0 0.0
        %498 = vmatprep.subr.mxu0 0.0
        %499 = vmatpush1.msra.mxu0 0.0
        %500 = vmatprep.subr.mxu0 0.0
        %501 = vmatpush1.msra.mxu0 0.0
        %502 = vmatprep.subr.mxu0 0.0
        %503 = vmatpush1.msra.mxu0 0.0
        %504 = vmatprep.subr.mxu0 0.0
        %505 = vmatpush1.msra.mxu0 0.0
        %506 = vmatprep.subr.mxu0 0.0
        %507 = vmatpush1.msra.mxu0 0.0
        %508 = vmatprep.subr.mxu0 0.0
        %509 = vmatpush1.msra.mxu0 0.0
        %510 = vmatprep.subr.mxu0 0.0
        %511 = vmatpush1.msra.mxu0 0.0
        %512 = vmatprep.subr.mxu0 0.0
        %513 = vmatpush1.msra.mxu0 0.0
        %514 = vmatprep.subr.mxu0 0.0
        %515 = vmatpush1.msra.mxu0 0.0
        %516 = vmatprep.subr.mxu0 0.0
        %517 = vmatpush1.msra.mxu0 0.0
        %518 = vmatprep.subr.mxu0 0.0
        %519 = vmatpush1.msra.mxu0 0.0
        %520 = vmatprep.mubr.f32.mxu0 0.0
        %521 = vmatmul.mubr.f32.gmra.mrb[0].mxu0 %v454
        %v522 = vpop.f32.mrb[0].mxu0
        %v523 = vadd.f32 0.0, %v522
        %v524 = vpop.f32.mrb[0].mxu0
        %525 = vdwg.mxu0
        %v526 = vmul.f32 %v523, 0.35355338
        %v527 = vld [vmem:[#allocation10] sm:$0xff]
        %v528 = vld [vmem:[#allocation10 + $0x8] sm:$0xff]
        %v529 = vld [vmem:[#allocation10 + $0x10] sm:$0xff]
        %v530 = vld [vmem:[#allocation10 + $0x18] sm:$0xff]
        %531 = vmatprep.subr.mxu0 0.0
        %532 = vmatpush1.msra.mxu0 %v527
        %533 = vmatprep.subr.mxu0 0.0
        %534 = vmatpush1.msra.mxu0 %v528
        %535 = vmatprep.subr.mxu0 0.0
        %536 = vmatpush1.msra.mxu0 %v529
        %537 = vmatprep.subr.mxu0 0.0
        %538 = vmatpush1.msra.mxu0 %v530
        %539 = vmatprep.subr.mxu0 0.0
        %540 = vmatpush1.msra.mxu0 0.0
        %541 = vmatprep.subr.mxu0 0.0
        %542 = vmatpush1.msra.mxu0 0.0
        %543 = vmatprep.subr.mxu0 0.0
        %544 = vmatpush1.msra.mxu0 0.0
        %545 = vmatprep.subr.mxu0 0.0
        %546 = vmatpush1.msra.mxu0 0.0
        %547 = vmatprep.subr.mxu0 0.0
        %548 = vmatpush1.msra.mxu0 0.0
        %549 = vmatprep.subr.mxu0 0.0
        %550 = vmatpush1.msra.mxu0 0.0
        %551 = vmatprep.subr.mxu0 0.0
        %552 = vmatpush1.msra.mxu0 0.0
        %553 = vmatprep.subr.mxu0 0.0
        %554 = vmatpush1.msra.mxu0 0.0
        %555 = vmatprep.subr.mxu0 0.0
        %556 = vmatpush1.msra.mxu0 0.0
        %557 = vmatprep.subr.mxu0 0.0
        %558 = vmatpush1.msra.mxu0 0.0
        %559 = vmatprep.subr.mxu0 0.0
        %560 = vmatpush1.msra.mxu0 0.0
        %561 = vmatprep.subr.mxu0 0.0
        %562 = vmatpush1.msra.mxu0 0.0
        %563 = vmatprep.subr.mxu0 0.0
        %564 = vmatpush1.msra.mxu0 0.0
        %565 = vmatprep.subr.mxu0 0.0
        %566 = vmatpush1.msra.mxu0 0.0
        %567 = vmatprep.subr.mxu0 0.0
        %568 = vmatpush1.msra.mxu0 0.0
        %569 = vmatprep.subr.mxu0 0.0
        %570 = vmatpush1.msra.mxu0 0.0
        %571 = vmatprep.subr.mxu0 0.0
        %572 = vmatpush1.msra.mxu0 0.0
        %573 = vmatprep.subr.mxu0 0.0
        %574 = vmatpush1.msra.mxu0 0.0
        %575 = vmatprep.subr.mxu0 0.0
        %576 = vmatpush1.msra.mxu0 0.0
        %577 = vmatprep.subr.mxu0 0.0
        %578 = vmatpush1.msra.mxu0 0.0
        %579 = vmatprep.subr.mxu0 0.0
        %580 = vmatpush1.msra.mxu0 0.0
        %581 = vmatprep.subr.mxu0 0.0
        %582 = vmatpush1.msra.mxu0 0.0
        %583 = vmatprep.subr.mxu0 0.0
        %584 = vmatpush1.msra.mxu0 0.0
        %585 = vmatprep.subr.mxu0 0.0
        %586 = vmatpush1.msra.mxu0 0.0
        %587 = vmatprep.subr.mxu0 0.0
        %588 = vmatpush1.msra.mxu0 0.0
        %589 = vmatprep.subr.mxu0 0.0
        %590 = vmatpush1.msra.mxu0 0.0
        %591 = vmatprep.subr.mxu0 0.0
        %592 = vmatpush1.msra.mxu0 0.0
        %593 = vmatprep.subr.mxu0 0.0
        %594 = vmatpush1.msra.mxu0 0.0
        %595 = vmatprep.mubr.f32.mxu0 0.0
        %596 = vmatmul.mubr.f32.gmra.mrb[0].mxu0 %v454
        %v597 = vpop.f32.mrb[0].mxu0
        %v598 = vadd.f32 0.0, %v597
        %v599 = vpop.f32.mrb[0].mxu0
        %600 = vdwg.mxu0
        %v601 = vld [vmem:[#allocation11] sm:$0xff]
        %v602 = vld [vmem:[#allocation11 + $0x8] sm:$0xff]
        %v603 = vld [vmem:[#allocation11 + $0x10] sm:$0xff]
        %v604 = vld [vmem:[#allocation11 + $0x18] sm:$0xff]
        %605 = vmatprep.subr.mxu0 0.0
        %606 = vmatpush1.msra.mxu0 %v601
        %607 = vmatprep.subr.mxu0 0.0
        %608 = vmatpush1.msra.mxu0 %v602
        %609 = vmatprep.subr.mxu0 0.0
        %610 = vmatpush1.msra.mxu0 %v603
        %611 = vmatprep.subr.mxu0 0.0
        %612 = vmatpush1.msra.mxu0 %v604
        %613 = vmatprep.subr.mxu0 0.0
        %614 = vmatpush1.msra.mxu0 0.0
        %615 = vmatprep.subr.mxu0 0.0
        %616 = vmatpush1.msra.mxu0 0.0
        %617 = vmatprep.subr.mxu0 0.0
        %618 = vmatpush1.msra.mxu0 0.0
        %619 = vmatprep.subr.mxu0 0.0
        %620 = vmatpush1.msra.mxu0 0.0
        %621 = vmatprep.subr.mxu0 0.0
        %622 = vmatpush1.msra.mxu0 0.0
        %623 = vmatprep.subr.mxu0 0.0
        %624 = vmatpush1.msra.mxu0 0.0
        %625 = vmatprep.subr.mxu0 0.0
        %626 = vmatpush1.msra.mxu0 0.0
        %627 = vmatprep.subr.mxu0 0.0
        %628 = vmatpush1.msra.mxu0 0.0
        %629 = vmatprep.subr.mxu0 0.0
        %630 = vmatpush1.msra.mxu0 0.0
        %631 = vmatprep.subr.mxu0 0.0
        %632 = vmatpush1.msra.mxu0 0.0
        %633 = vmatprep.subr.mxu0 0.0
        %634 = vmatpush1.msra.mxu0 0.0
        %635 = vmatprep.subr.mxu0 0.0
        %636 = vmatpush1.msra.mxu0 0.0
        %637 = vmatprep.subr.mxu0 0.0
        %638 = vmatpush1.msra.mxu0 0.0
        %639 = vmatprep.subr.mxu0 0.0
        %640 = vmatpush1.msra.mxu0 0.0
        %641 = vmatprep.subr.mxu0 0.0
        %642 = vmatpush1.msra.mxu0 0.0
        %643 = vmatprep.subr.mxu0 0.0
        %644 = vmatpush1.msra.mxu0 0.0
        %645 = vmatprep.subr.mxu0 0.0
        %646 = vmatpush1.msra.mxu0 0.0
        %647 = vmatprep.subr.mxu0 0.0
        %648 = vmatpush1.msra.mxu0 0.0
        %649 = vmatprep.subr.mxu0 0.0
        %650 = vmatpush1.msra.mxu0 0.0
        %651 = vmatprep.subr.mxu0 0.0
        %652 = vmatpush1.msra.mxu0 0.0
        %653 = vmatprep.subr.mxu0 0.0
        %654 = vmatpush1.msra.mxu0 0.0
        %655 = vmatprep.subr.mxu0 0.0
        %656 = vmatpush1.msra.mxu0 0.0
        %657 = vmatprep.subr.mxu0 0.0
        %658 = vmatpush1.msra.mxu0 0.0
        %659 = vmatprep.subr.mxu0 0.0
        %660 = vmatpush1.msra.mxu0 0.0
        %661 = vmatprep.subr.mxu0 0.0
        %662 = vmatpush1.msra.mxu0 0.0
        %663 = vmatprep.subr.mxu0 0.0
        %664 = vmatpush1.msra.mxu0 0.0
        %665 = vmatprep.subr.mxu0 0.0
        %666 = vmatpush1.msra.mxu0 0.0
        %667 = vmatprep.subr.mxu0 0.0
        %668 = vmatpush1.msra.mxu0 0.0
        %669 = vmatprep.mubr.f32.mxu0 0.0
        %670 = vmatmul.mubr.f32.gmra.mrb[0].mxu0 %v454
        %v671 = vpop.f32.mrb[0].mxu0
        %v672 = vadd.f32 0.0, %v671
        %v673 = vpop.f32.mrb[0].mxu0
        %674 = vdwg.mxu0
        %vm675 = vcmask 64512
        %v677 = vsel %vm675, %v526, 0
        %v680 = vsel %vm675, %v598, 0
        %682 = vmatprep.subr.mxu0 0.0
        %683 = vmatpush1.xpose.msra.mxu0 %v680
        %684 = vmatprep.subr.mxu0 0.0
        %685 = vmatpush1.xpose.msra.mxu0 0.0
        %686 = vmatprep.subr.mxu0 0.0
        %687 = vmatpush1.xpose.msra.mxu0 0.0
        %688 = vmatprep.subr.mxu0 0.0
        %689 = vmatpush1.xpose.msra.mxu0 0.0
        %690 = vmatprep.subr.mxu0 0.0
        %691 = vmatpush1.xpose.msra.mxu0 0.0
        %692 = vmatprep.subr.mxu0 0.0
        %693 = vmatpush1.xpose.msra.mxu0 0.0
        %694 = vmatprep.subr.mxu0 0.0
        %695 = vmatpush1.xpose.msra.mxu0 0.0
        %696 = vmatprep.subr.mxu0 0.0
        %697 = vmatpush1.xpose.msra.mxu0 0.0
        %698 = vmatprep.subr.mxu0 0.0
        %699 = vmatpush1.xpose.msra.mxu0 0.0
        %700 = vmatprep.subr.mxu0 0.0
        %701 = vmatpush1.xpose.msra.mxu0 0.0
        %702 = vmatprep.subr.mxu0 0.0
        %703 = vmatpush1.xpose.msra.mxu0 0.0
        %704 = vmatprep.subr.mxu0 0.0
        %705 = vmatpush1.xpose.msra.mxu0 0.0
        %706 = vmatprep.subr.mxu0 0.0
        %707 = vmatpush1.xpose.msra.mxu0 0.0
        %708 = vmatprep.subr.mxu0 0.0
        %709 = vmatpush1.xpose.msra.mxu0 0.0
        %710 = vmatprep.subr.mxu0 0.0
        %711 = vmatpush1.xpose.msra.mxu0 0.0
        %712 = vmatprep.subr.mxu0 0.0
        %713 = vmatpush1.xpose.msra.mxu0 0.0
        %714 = vmatprep.subr.mxu0 0.0
        %715 = vmatpush1.xpose.msra.mxu0 0.0
        %716 = vmatprep.subr.mxu0 0.0
        %717 = vmatpush1.xpose.msra.mxu0 0.0
        %718 = vmatprep.subr.mxu0 0.0
        %719 = vmatpush1.xpose.msra.mxu0 0.0
        %720 = vmatprep.subr.mxu0 0.0
        %721 = vmatpush1.xpose.msra.mxu0 0.0
        %722 = vmatprep.subr.mxu0 0.0
        %723 = vmatpush1.xpose.msra.mxu0 0.0
        %724 = vmatprep.subr.mxu0 0.0
        %725 = vmatpush1.xpose.msra.mxu0 0.0
        %726 = vmatprep.subr.mxu0 0.0
        %727 = vmatpush1.xpose.msra.mxu0 0.0
        %728 = vmatprep.subr.mxu0 0.0
        %729 = vmatpush1.xpose.msra.mxu0 0.0
        %730 = vmatprep.subr.mxu0 0.0
        %731 = vmatpush1.xpose.msra.mxu0 0.0
        %732 = vmatprep.subr.mxu0 0.0
        %733 = vmatpush1.xpose.msra.mxu0 0.0
        %734 = vmatprep.subr.mxu0 0.0
        %735 = vmatpush1.xpose.msra.mxu0 0.0
        %736 = vmatprep.subr.mxu0 0.0
        %737 = vmatpush1.xpose.msra.mxu0 0.0
        %738 = vmatprep.subr.mxu0 0.0
        %739 = vmatpush1.xpose.msra.mxu0 0.0
        %740 = vmatprep.subr.mxu0 0.0
        %741 = vmatpush1.xpose.msra.mxu0 0.0
        %742 = vmatprep.subr.mxu0 0.0
        %743 = vmatpush1.xpose.msra.mxu0 0.0
        %744 = vmatprep.subr.mxu0 0.0
        %745 = vmatpush1.xpose.msra.mxu0 0.0
        %746 = vmatprep.mubr.f32.mxu0 0.0
        %747 = vmatmul.mubr.f32.gmra.mrb[0].mxu0 %v677
        %v748 = vpop.f32.mrb[0].mxu0
        %v749 = vadd.f32 0.0, %v748
        %v750 = vpop.f32.mrb[0].mxu0
        %751 = vdwg.mxu0
        %v752 = vsel %vm675, %v749, -inf
        %753 = vmax.xlane.f32.xlu0 %v752
        %v754 = vpop.xlane.xlu0 %753
        %v755 = vsub.f32 %v749, %v754
        %v756 = vmul.f32 %v755, 1.442695
        %v757 = vpow.pop %v756
        %v758 = vsel %vm675, %v757, 0.0
        %759 = vadd.xlane.f32.xlu0 %v758
        %v760 = vpop.xlane.xlu0 %759
        %v761 = vrcp.pop %v760
        %v762 = vmul.f32 %v757, %v761
        %v764 = vsel %vm675, %v762, 0
        %766 = vmatprep.subr.mxu0 0.0
        %767 = vmatpush1.msra.mxu0 %v672
        %768 = vmatprep.subr.mxu0 0.0
        %769 = vmatpush1.msra.mxu0 0.0
        %770 = vmatprep.subr.mxu0 0.0
        %771 = vmatpush1.msra.mxu0 0.0
        %772 = vmatprep.subr.mxu0 0.0
        %773 = vmatpush1.msra.mxu0 0.0
        %774 = vmatprep.subr.mxu0 0.0
        %775 = vmatpush1.msra.mxu0 0.0
        %776 = vmatprep.subr.mxu0 0.0
        %777 = vmatpush1.msra.mxu0 0.0
        %778 = vmatprep.subr.mxu0 0.0
        %779 = vmatpush1.msra.mxu0 0.0
        %780 = vmatprep.subr.mxu0 0.0
        %781 = vmatpush1.msra.mxu0 0.0
        %782 = vmatprep.subr.mxu0 0.0
        %783 = vmatpush1.msra.mxu0 0.0
        %784 = vmatprep.subr.mxu0 0.0
        %785 = vmatpush1.msra.mxu0 0.0
        %786 = vmatprep.subr.mxu0 0.0
        %787 = vmatpush1.msra.mxu0 0.0
        %788 = vmatprep.subr.mxu0 0.0
        %789 = vmatpush1.msra.mxu0 0.0
        %790 = vmatprep.subr.mxu0 0.0
        %791 = vmatpush1.msra.mxu0 0.0
        %792 = vmatprep.subr.mxu0 0.0
        %793 = vmatpush1.msra.mxu0 0.0
        %794 = vmatprep.subr.mxu0 0.0
        %795 = vmatpush1.msra.mxu0 0.0
        %796 = vmatprep.subr.mxu0 0.0
        %797 = vmatpush1.msra.mxu0 0.0
        %798 = vmatprep.subr.mxu0 0.0
        %799 = vmatpush1.msra.mxu0 0.0
        %800 = vmatprep.subr.mxu0 0.0
        %801 = vmatpush1.msra.mxu0 0.0
        %802 = vmatprep.subr.mxu0 0.0
        %803 = vmatpush1.msra.mxu0 0.0
        %804 = vmatprep.subr.mxu0 0.0
        %805 = vmatpush1.msra.mxu0 0.0
        %806 = vmatprep.subr.mxu0 0.0
        %807 = vmatpush1.msra.mxu0 0.0
        %808 = vmatprep.subr.mxu0 0.0
        %809 = vmatpush1.msra.mxu0 0.0
        %810 = vmatprep.subr.mxu0 0.0
        %811 = vmatpush1.msra.mxu0 0.0
        %812 = vmatprep.subr.mxu0 0.0
        %813 = vmatpush1.msra.mxu0 0.0
        %814 = vmatprep.subr.mxu0 0.0
        %815 = vmatpush1.msra.mxu0 0.0
        %816 = vmatprep.subr.mxu0 0.0
        %817 = vmatpush1.msra.mxu0 0.0
        %818 = vmatprep.subr.mxu0 0.0
        %819 = vmatpush1.msra.mxu0 0.0
        %820 = vmatprep.subr.mxu0 0.0
        %821 = vmatpush1.msra.mxu0 0.0
        %822 = vmatprep.subr.mxu0 0.0
        %823 = vmatpush1.msra.mxu0 0.0
        %824 = vmatprep.subr.mxu0 0.0
        %825 = vmatpush1.msra.mxu0 0.0
        %826 = vmatprep.subr.mxu0 0.0
        %827 = vmatpush1.msra.mxu0 0.0
        %828 = vmatprep.subr.mxu0 0.0
        %829 = vmatpush1.msra.mxu0 0.0
        %830 = vmatprep.mubr.f32.mxu0 0.0
        %831 = vmatmul.mubr.f32.gmra.mrb[0].mxu0 %v764
        %v832 = vpop.f32.mrb[0].mxu0
        %v833 = vadd.f32 0.0, %v832
        %v834 = vpop.f32.mrb[0].mxu0
        %835 = vdwg.mxu0
        %836 = vrot.lane.b32.xlu0 %v526, 120
        %v837 = vpop.permute.xlu0 %836
        %838 = vrot.lane.b32.xlu0 %v598, 120
        %v839 = vpop.permute.xlu0 %838
        %v840 = vsel %vm675, %v837, 0
        %v842 = vsel %vm675, %v839, 0
        %844 = vmatprep.subr.mxu0 0.0
        %845 = vmatpush1.xpose.msra.mxu0 %v842
        %846 = vmatprep.subr.mxu0 0.0
        %847 = vmatpush1.xpose.msra.mxu0 0.0
        %848 = vmatprep.subr.mxu0 0.0
        %849 = vmatpush1.xpose.msra.mxu0 0.0
        %850 = vmatprep.subr.mxu0 0.0
        %851 = vmatpush1.xpose.msra.mxu0 0.0
        %852 = vmatprep.subr.mxu0 0.0
        %853 = vmatpush1.xpose.msra.mxu0 0.0
        %854 = vmatprep.subr.mxu0 0.0
        %855 = vmatpush1.xpose.msra.mxu0 0.0
        %856 = vmatprep.subr.mxu0 0.0
        %857 = vmatpush1.xpose.msra.mxu0 0.0
        %858 = vmatprep.subr.mxu0 0.0
        %859 = vmatpush1.xpose.msra.mxu0 0.0
        %860 = vmatprep.subr.mxu0 0.0
        %861 = vmatpush1.xpose.msra.mxu0 0.0
        %862 = vmatprep.subr.mxu0 0.0
        %863 = vmatpush1.xpose.msra.mxu0 0.0
        %864 = vmatprep.subr.mxu0 0.0
        %865 = vmatpush1.xpose.msra.mxu0 0.0
        %866 = vmatprep.subr.mxu0 0.0
        %867 = vmatpush1.xpose.msra.mxu0 0.0
        %868 = vmatprep.subr.mxu0 0.0
        %869 = vmatpush1.xpose.msra.mxu0 0.0
        %870 = vmatprep.subr.mxu0 0.0
        %871 = vmatpush1.xpose.msra.mxu0 0.0
        %872 = vmatprep.subr.mxu0 0.0
        %873 = vmatpush1.xpose.msra.mxu0 0.0
        %874 = vmatprep.subr.mxu0 0.0
        %875 = vmatpush1.xpose.msra.mxu0 0.0
        %876 = vmatprep.subr.mxu0 0.0
        %877 = vmatpush1.xpose.msra.mxu0 0.0
        %878 = vmatprep.subr.mxu0 0.0
        %879 = vmatpush1.xpose.msra.mxu0 0.0
        %880 = vmatprep.subr.mxu0 0.0
        %881 = vmatpush1.xpose.msra.mxu0 0.0
        %882 = vmatprep.subr.mxu0 0.0
        %883 = vmatpush1.xpose.msra.mxu0 0.0
        %884 = vmatprep.subr.mxu0 0.0
        %885 = vmatpush1.xpose.msra.mxu0 0.0
        %886 = vmatprep.subr.mxu0 0.0
        %887 = vmatpush1.xpose.msra.mxu0 0.0
        %888 = vmatprep.subr.mxu0 0.0
        %889 = vmatpush1.xpose.msra.mxu0 0.0
        %890 = vmatprep.subr.mxu0 0.0
        %891 = vmatpush1.xpose.msra.mxu0 0.0
        %892 = vmatprep.subr.mxu0 0.0
        %893 = vmatpush1.xpose.msra.mxu0 0.0
        %894 = vmatprep.subr.mxu0 0.0
        %895 = vmatpush1.xpose.msra.mxu0 0.0
        %896 = vmatprep.subr.mxu0 0.0
        %897 = vmatpush1.xpose.msra.mxu0 0.0
        %898 = vmatprep.subr.mxu0 0.0
        %899 = vmatpush1.xpose.msra.mxu0 0.0
        %900 = vmatprep.subr.mxu0 0.0
        %901 = vmatpush1.xpose.msra.mxu0 0.0
        %902 = vmatprep.subr.mxu0 0.0
        %903 = vmatpush1.xpose.msra.mxu0 0.0
        %904 = vmatprep.subr.mxu0 0.0
        %905 = vmatpush1.xpose.msra.mxu0 0.0
        %906 = vmatprep.subr.mxu0 0.0
        %907 = vmatpush1.xpose.msra.mxu0 0.0
        %908 = vmatprep.mubr.f32.mxu0 0.0
        %909 = vmatmul.mubr.f32.gmra.mrb[0].mxu0 %v840
        %v910 = vpop.f32.mrb[0].mxu0
        %v911 = vadd.f32 0.0, %v910
        %v912 = vpop.f32.mrb[0].mxu0
        %913 = vdwg.mxu0
        %v914 = vsel %vm675, %v911, -inf
        %915 = vmax.xlane.f32.xlu0 %v914
        %v916 = vpop.xlane.xlu0 %915
        %v917 = vsub.f32 %v911, %v916
        %v918 = vmul.f32 %v917, 1.442695
        %v919 = vpow.pop %v918
        %v920 = vsel %vm675, %v919, 0.0
        %921 = vadd.xlane.f32.xlu0 %v920
        %v922 = vpop.xlane.xlu0 %921
        %v923 = vrcp.pop %v922
        %v924 = vmul.f32 %v919, %v923
        %926 = vrot.lane.b32.xlu0 %v672, 120
        %v927 = vpop.permute.xlu0 %926
        %v930 = vsel %vm675, %v924, 0
        %932 = vmatprep.subr.mxu0 0.0
        %933 = vmatpush1.msra.mxu0 %v927
        %934 = vmatprep.subr.mxu0 0.0
        %935 = vmatpush1.msra.mxu0 0.0
        %936 = vmatprep.subr.mxu0 0.0
        %937 = vmatpush1.msra.mxu0 0.0
        %938 = vmatprep.subr.mxu0 0.0
        %939 = vmatpush1.msra.mxu0 0.0
        %940 = vmatprep.subr.mxu0 0.0
        %941 = vmatpush1.msra.mxu0 0.0
        %942 = vmatprep.subr.mxu0 0.0
        %943 = vmatpush1.msra.mxu0 0.0
        %944 = vmatprep.subr.mxu0 0.0
        %945 = vmatpush1.msra.mxu0 0.0
        %946 = vmatprep.subr.mxu0 0.0
        %947 = vmatpush1.msra.mxu0 0.0
        %948 = vmatprep.subr.mxu0 0.0
        %949 = vmatpush1.msra.mxu0 0.0
        %950 = vmatprep.subr.mxu0 0.0
        %951 = vmatpush1.msra.mxu0 0.0
        %952 = vmatprep.subr.mxu0 0.0
        %953 = vmatpush1.msra.mxu0 0.0
        %954 = vmatprep.subr.mxu0 0.0
        %955 = vmatpush1.msra.mxu0 0.0
        %956 = vmatprep.subr.mxu0 0.0
        %957 = vmatpush1.msra.mxu0 0.0
        %958 = vmatprep.subr.mxu0 0.0
        %959 = vmatpush1.msra.mxu0 0.0
        %960 = vmatprep.subr.mxu0 0.0
        %961 = vmatpush1.msra.mxu0 0.0
        %962 = vmatprep.subr.mxu0 0.0
        %963 = vmatpush1.msra.mxu0 0.0
        %964 = vmatprep.subr.mxu0 0.0
        %965 = vmatpush1.msra.mxu0 0.0
        %966 = vmatprep.subr.mxu0 0.0
        %967 = vmatpush1.msra.mxu0 0.0
        %968 = vmatprep.subr.mxu0 0.0
        %969 = vmatpush1.msra.mxu0 0.0
        %970 = vmatprep.subr.mxu0 0.0
        %971 = vmatpush1.msra.mxu0 0.0
        %972 = vmatprep.subr.mxu0 0.0
        %973 = vmatpush1.msra.mxu0 0.0
        %974 = vmatprep.subr.mxu0 0.0
        %975 = vmatpush1.msra.mxu0 0.0
        %976 = vmatprep.subr.mxu0 0.0
        %977 = vmatpush1.msra.mxu0 0.0
        %978 = vmatprep.subr.mxu0 0.0
        %979 = vmatpush1.msra.mxu0 0.0
        %980 = vmatprep.subr.mxu0 0.0
        %981 = vmatpush1.msra.mxu0 0.0
        %982 = vmatprep.subr.mxu0 0.0
        %983 = vmatpush1.msra.mxu0 0.0
        %984 = vmatprep.subr.mxu0 0.0
        %985 = vmatpush1.msra.mxu0 0.0
        %986 = vmatprep.subr.mxu0 0.0
        %987 = vmatpush1.msra.mxu0 0.0
        %988 = vmatprep.subr.mxu0 0.0
        %989 = vmatpush1.msra.mxu0 0.0
        %990 = vmatprep.subr.mxu0 0.0
        %991 = vmatpush1.msra.mxu0 0.0
        %992 = vmatprep.subr.mxu0 0.0
        %993 = vmatpush1.msra.mxu0 0.0
        %994 = vmatprep.subr.mxu0 0.0
        %995 = vmatpush1.msra.mxu0 0.0
        %996 = vmatprep.mubr.f32.mxu0 0.0
        %997 = vmatmul.mubr.f32.gmra.mrb[0].mxu0 %v930
        %v998 = vpop.f32.mrb[0].mxu0
        %v999 = vadd.f32 0.0, %v998
        %v1000 = vpop.f32.mrb[0].mxu0
        %1001 = vdwg.mxu0
        %1002 = vrot.lane.b32.xlu0 %v526, 112
        %v1003 = vpop.permute.xlu0 %1002
        %1004 = vrot.lane.b32.xlu0 %v598, 112
        %v1005 = vpop.permute.xlu0 %1004
        %v1006 = vsel %vm675, %v1003, 0
        %v1008 = vsel %vm675, %v1005, 0
        %1010 = vmatprep.subr.mxu0 0.0
        %1011 = vmatpush1.xpose.msra.mxu0 %v1008
        %1012 = vmatprep.subr.mxu0 0.0
        %1013 = vmatpush1.xpose.msra.mxu0 0.0
        %1014 = vmatprep.subr.mxu0 0.0
        %1015 = vmatpush1.xpose.msra.mxu0 0.0
        %1016 = vmatprep.subr.mxu0 0.0
        %1017 = vmatpush1.xpose.msra.mxu0 0.0
        %1018 = vmatprep.subr.mxu0 0.0
        %1019 = vmatpush1.xpose.msra.mxu0 0.0
        %1020 = vmatprep.subr.mxu0 0.0
        %1021 = vmatpush1.xpose.msra.mxu0 0.0
        %1022 = vmatprep.subr.mxu0 0.0
        %1023 = vmatpush1.xpose.msra.mxu0 0.0
        %1024 = vmatprep.subr.mxu0 0.0
        %1025 = vmatpush1.xpose.msra.mxu0 0.0
        %1026 = vmatprep.subr.mxu0 0.0
        %1027 = vmatpush1.xpose.msra.mxu0 0.0
        %1028 = vmatprep.subr.mxu0 0.0
        %1029 = vmatpush1.xpose.msra.mxu0 0.0
        %1030 = vmatprep.subr.mxu0 0.0
        %1031 = vmatpush1.xpose.msra.mxu0 0.0
        %1032 = vmatprep.subr.mxu0 0.0
        %1033 = vmatpush1.xpose.msra.mxu0 0.0
        %1034 = vmatprep.subr.mxu0 0.0
        %1035 = vmatpush1.xpose.msra.mxu0 0.0
        %1036 = vmatprep.subr.mxu0 0.0
        %1037 = vmatpush1.xpose.msra.mxu0 0.0
        %1038 = vmatprep.subr.mxu0 0.0
        %1039 = vmatpush1.xpose.msra.mxu0 0.0
        %1040 = vmatprep.subr.mxu0 0.0
        %1041 = vmatpush1.xpose.msra.mxu0 0.0
        %1042 = vmatprep.subr.mxu0 0.0
        %1043 = vmatpush1.xpose.msra.mxu0 0.0
        %1044 = vmatprep.subr.mxu0 0.0
        %1045 = vmatpush1.xpose.msra.mxu0 0.0
        %1046 = vmatprep.subr.mxu0 0.0
        %1047 = vmatpush1.xpose.msra.mxu0 0.0
        %1048 = vmatprep.subr.mxu0 0.0
        %1049 = vmatpush1.xpose.msra.mxu0 0.0
        %1050 = vmatprep.subr.mxu0 0.0
        %1051 = vmatpush1.xpose.msra.mxu0 0.0
        %1052 = vmatprep.subr.mxu0 0.0
        %1053 = vmatpush1.xpose.msra.mxu0 0.0
        %1054 = vmatprep.subr.mxu0 0.0
        %1055 = vmatpush1.xpose.msra.mxu0 0.0
        %1056 = vmatprep.subr.mxu0 0.0
        %1057 = vmatpush1.xpose.msra.mxu0 0.0
        %1058 = vmatprep.subr.mxu0 0.0
        %1059 = vmatpush1.xpose.msra.mxu0 0.0
        %1060 = vmatprep.subr.mxu0 0.0
        %1061 = vmatpush1.xpose.msra.mxu0 0.0
        %1062 = vmatprep.subr.mxu0 0.0
        %1063 = vmatpush1.xpose.msra.mxu0 0.0
        %1064 = vmatprep.subr.mxu0 0.0
        %1065 = vmatpush1.xpose.msra.mxu0 0.0
        %1066 = vmatprep.subr.mxu0 0.0
        %1067 = vmatpush1.xpose.msra.mxu0 0.0
        %1068 = vmatprep.subr.mxu0 0.0
        %1069 = vmatpush1.xpose.msra.mxu0 0.0
        %1070 = vmatprep.subr.mxu0 0.0
        %1071 = vmatpush1.xpose.msra.mxu0 0.0
        %1072 = vmatprep.subr.mxu0 0.0
        %1073 = vmatpush1.xpose.msra.mxu0 0.0
        %1074 = vmatprep.mubr.f32.mxu0 0.0
        %1075 = vmatmul.mubr.f32.gmra.mrb[0].mxu0 %v1006
        %v1076 = vpop.f32.mrb[0].mxu0
        %v1077 = vadd.f32 0.0, %v1076
        %v1078 = vpop.f32.mrb[0].mxu0
        %1079 = vdwg.mxu0
        %v1080 = vsel %vm675, %v1077, -inf
        %1081 = vmax.xlane.f32.xlu0 %v1080
        %v1082 = vpop.xlane.xlu0 %1081
        %v1083 = vsub.f32 %v1077, %v1082
        %v1084 = vmul.f32 %v1083, 1.442695
        %v1085 = vpow.pop %v1084
        %v1086 = vsel %vm675, %v1085, 0.0
        %1087 = vadd.xlane.f32.xlu0 %v1086
        %v1088 = vpop.xlane.xlu0 %1087
        %v1089 = vrcp.pop %v1088
        %v1090 = vmul.f32 %v1085, %v1089
        %1091 = vrot.lane.b32.xlu0 %v672, 112
        %v1092 = vpop.permute.xlu0 %1091
        %v1095 = vsel %vm675, %v1090, 0
        %1097 = vmatprep.subr.mxu0 0.0
        %1098 = vmatpush1.msra.mxu0 %v1092
        %1099 = vmatprep.subr.mxu0 0.0
        %1100 = vmatpush1.msra.mxu0 0.0
        %1101 = vmatprep.subr.mxu0 0.0
        %1102 = vmatpush1.msra.mxu0 0.0
        %1103 = vmatprep.subr.mxu0 0.0
        %1104 = vmatpush1.msra.mxu0 0.0
        %1105 = vmatprep.subr.mxu0 0.0
        %1106 = vmatpush1.msra.mxu0 0.0
        %1107 = vmatprep.subr.mxu0 0.0
        %1108 = vmatpush1.msra.mxu0 0.0
        %1109 = vmatprep.subr.mxu0 0.0
        %1110 = vmatpush1.msra.mxu0 0.0
        %1111 = vmatprep.subr.mxu0 0.0
        %1112 = vmatpush1.msra.mxu0 0.0
        %1113 = vmatprep.subr.mxu0 0.0
        %1114 = vmatpush1.msra.mxu0 0.0
        %1115 = vmatprep.subr.mxu0 0.0
        %1116 = vmatpush1.msra.mxu0 0.0
        %1117 = vmatprep.subr.mxu0 0.0
        %1118 = vmatpush1.msra.mxu0 0.0
        %1119 = vmatprep.subr.mxu0 0.0
        %1120 = vmatpush1.msra.mxu0 0.0
        %1121 = vmatprep.subr.mxu0 0.0
        %1122 = vmatpush1.msra.mxu0 0.0
        %1123 = vmatprep.subr.mxu0 0.0
        %1124 = vmatpush1.msra.mxu0 0.0
        %1125 = vmatprep.subr.mxu0 0.0
        %1126 = vmatpush1.msra.mxu0 0.0
        %1127 = vmatprep.subr.mxu0 0.0
        %1128 = vmatpush1.msra.mxu0 0.0
        %1129 = vmatprep.subr.mxu0 0.0
        %1130 = vmatpush1.msra.mxu0 0.0
        %1131 = vmatprep.subr.mxu0 0.0
        %1132 = vmatpush1.msra.mxu0 0.0
        %1133 = vmatprep.subr.mxu0 0.0
        %1134 = vmatpush1.msra.mxu0 0.0
        %1135 = vmatprep.subr.mxu0 0.0
        %1136 = vmatpush1.msra.mxu0 0.0
        %1137 = vmatprep.subr.mxu0 0.0
        %1138 = vmatpush1.msra.mxu0 0.0
        %1139 = vmatprep.subr.mxu0 0.0
        %1140 = vmatpush1.msra.mxu0 0.0
        %1141 = vmatprep.subr.mxu0 0.0
        %1142 = vmatpush1.msra.mxu0 0.0
        %1143 = vmatprep.subr.mxu0 0.0
        %1144 = vmatpush1.msra.mxu0 0.0
        %1145 = vmatprep.subr.mxu0 0.0
        %1146 = vmatpush1.msra.mxu0 0.0
        %1147 = vmatprep.subr.mxu0 0.0
        %1148 = vmatpush1.msra.mxu0 0.0
        %1149 = vmatprep.subr.mxu0 0.0
        %1150 = vmatpush1.msra.mxu0 0.0
        %1151 = vmatprep.subr.mxu0 0.0
        %1152 = vmatpush1.msra.mxu0 0.0
        %1153 = vmatprep.subr.mxu0 0.0
        %1154 = vmatpush1.msra.mxu0 0.0
        %1155 = vmatprep.subr.mxu0 0.0
        %1156 = vmatpush1.msra.mxu0 0.0
        %1157 = vmatprep.subr.mxu0 0.0
        %1158 = vmatpush1.msra.mxu0 0.0
        %1159 = vmatprep.subr.mxu0 0.0
        %1160 = vmatpush1.msra.mxu0 0.0
        %1161 = vmatprep.mubr.f32.mxu0 0.0
        %1162 = vmatmul.mubr.f32.gmra.mrb[0].mxu0 %v1095
        %v1163 = vpop.f32.mrb[0].mxu0
        %v1164 = vadd.f32 0.0, %v1163
        %v1165 = vpop.f32.mrb[0].mxu0
        %1166 = vdwg.mxu0
        %1167 = vrot.lane.b32.xlu0 %v526, 104
        %v1168 = vpop.permute.xlu0 %1167
        %1169 = vrot.lane.b32.xlu0 %v598, 104
        %v1170 = vpop.permute.xlu0 %1169
        %v1171 = vsel %vm675, %v1168, 0
        %v1173 = vsel %vm675, %v1170, 0
        %1175 = vmatprep.subr.mxu0 0.0
        %1176 = vmatpush1.xpose.msra.mxu0 %v1173
        %1177 = vmatprep.subr.mxu0 0.0
        %1178 = vmatpush1.xpose.msra.mxu0 0.0
        %1179 = vmatprep.subr.mxu0 0.0
        %1180 = vmatpush1.xpose.msra.mxu0 0.0
        %1181 = vmatprep.subr.mxu0 0.0
        %1182 = vmatpush1.xpose.msra.mxu0 0.0
        %1183 = vmatprep.subr.mxu0 0.0
        %1184 = vmatpush1.xpose.msra.mxu0 0.0
        %1185 = vmatprep.subr.mxu0 0.0
        %1186 = vmatpush1.xpose.msra.mxu0 0.0
        %1187 = vmatprep.subr.mxu0 0.0
        %1188 = vmatpush1.xpose.msra.mxu0 0.0
        %1189 = vmatprep.subr.mxu0 0.0
        %1190 = vmatpush1.xpose.msra.mxu0 0.0
        %1191 = vmatprep.subr.mxu0 0.0
        %1192 = vmatpush1.xpose.msra.mxu0 0.0
        %1193 = vmatprep.subr.mxu0 0.0
        %1194 = vmatpush1.xpose.msra.mxu0 0.0
        %1195 = vmatprep.subr.mxu0 0.0
        %1196 = vmatpush1.xpose.msra.mxu0 0.0
        %1197 = vmatprep.subr.mxu0 0.0
        %1198 = vmatpush1.xpose.msra.mxu0 0.0
        %1199 = vmatprep.subr.mxu0 0.0
        %1200 = vmatpush1.xpose.msra.mxu0 0.0
        %1201 = vmatprep.subr.mxu0 0.0
        %1202 = vmatpush1.xpose.msra.mxu0 0.0
        %1203 = vmatprep.subr.mxu0 0.0
        %1204 = vmatpush1.xpose.msra.mxu0 0.0
        %1205 = vmatprep.subr.mxu0 0.0
        %1206 = vmatpush1.xpose.msra.mxu0 0.0
        %1207 = vmatprep.subr.mxu0 0.0
        %1208 = vmatpush1.xpose.msra.mxu0 0.0
        %1209 = vmatprep.subr.mxu0 0.0
        %1210 = vmatpush1.xpose.msra.mxu0 0.0
        %1211 = vmatprep.subr.mxu0 0.0
        %1212 = vmatpush1.xpose.msra.mxu0 0.0
        %1213 = vmatprep.subr.mxu0 0.0
        %1214 = vmatpush1.xpose.msra.mxu0 0.0
        %1215 = vmatprep.subr.mxu0 0.0
        %1216 = vmatpush1.xpose.msra.mxu0 0.0
        %1217 = vmatprep.subr.mxu0 0.0
        %1218 = vmatpush1.xpose.msra.mxu0 0.0
        %1219 = vmatprep.subr.mxu0 0.0
        %1220 = vmatpush1.xpose.msra.mxu0 0.0
        %1221 = vmatprep.subr.mxu0 0.0
        %1222 = vmatpush1.xpose.msra.mxu0 0.0
        %1223 = vmatprep.subr.mxu0 0.0
        %1224 = vmatpush1.xpose.msra.mxu0 0.0
        %1225 = vmatprep.subr.mxu0 0.0
        %1226 = vmatpush1.xpose.msra.mxu0 0.0
        %1227 = vmatprep.subr.mxu0 0.0
        %1228 = vmatpush1.xpose.msra.mxu0 0.0
        %1229 = vmatprep.subr.mxu0 0.0
        %1230 = vmatpush1.xpose.msra.mxu0 0.0
        %1231 = vmatprep.subr.mxu0 0.0
        %1232 = vmatpush1.xpose.msra.mxu0 0.0
        %1233 = vmatprep.subr.mxu0 0.0
        %1234 = vmatpush1.xpose.msra.mxu0 0.0
        %1235 = vmatprep.subr.mxu0 0.0
        %1236 = vmatpush1.xpose.msra.mxu0 0.0
        %1237 = vmatprep.subr.mxu0 0.0
        %1238 = vmatpush1.xpose.msra.mxu0 0.0
        %1239 = vmatprep.mubr.f32.mxu0 0.0
        %1240 = vmatmul.mubr.f32.gmra.mrb[0].mxu0 %v1171
        %v1241 = vpop.f32.mrb[0].mxu0
        %v1242 = vadd.f32 0.0, %v1241
        %v1243 = vpop.f32.mrb[0].mxu0
        %1244 = vdwg.mxu0
        %v1245 = vsel %vm675, %v1242, -inf
        %1246 = vmax.xlane.f32.xlu0 %v1245
        %v1247 = vpop.xlane.xlu0 %1246
        %v1248 = vsub.f32 %v1242, %v1247
        %v1249 = vmul.f32 %v1248, 1.442695
        %v1250 = vpow.pop %v1249
        %v1251 = vsel %vm675, %v1250, 0.0
        %1252 = vadd.xlane.f32.xlu0 %v1251
        %v1253 = vpop.xlane.xlu0 %1252
        %v1254 = vrcp.pop %v1253
        %v1255 = vmul.f32 %v1250, %v1254
        %1256 = vrot.lane.b32.xlu0 %v672, 104
        %v1257 = vpop.permute.xlu0 %1256
        %v1260 = vsel %vm675, %v1255, 0
        %1262 = vmatprep.subr.mxu0 0.0
        %1263 = vmatpush1.msra.mxu0 %v1257
        %1264 = vmatprep.subr.mxu0 0.0
        %1265 = vmatpush1.msra.mxu0 0.0
        %1266 = vmatprep.subr.mxu0 0.0
        %1267 = vmatpush1.msra.mxu0 0.0
        %1268 = vmatprep.subr.mxu0 0.0
        %1269 = vmatpush1.msra.mxu0 0.0
        %1270 = vmatprep.subr.mxu0 0.0
        %1271 = vmatpush1.msra.mxu0 0.0
        %1272 = vmatprep.subr.mxu0 0.0
        %1273 = vmatpush1.msra.mxu0 0.0
        %1274 = vmatprep.subr.mxu0 0.0
        %1275 = vmatpush1.msra.mxu0 0.0
        %1276 = vmatprep.subr.mxu0 0.0
        %1277 = vmatpush1.msra.mxu0 0.0
        %1278 = vmatprep.subr.mxu0 0.0
        %1279 = vmatpush1.msra.mxu0 0.0
        %1280 = vmatprep.subr.mxu0 0.0
        %1281 = vmatpush1.msra.mxu0 0.0
        %1282 = vmatprep.subr.mxu0 0.0
        %1283 = vmatpush1.msra.mxu0 0.0
        %1284 = vmatprep.subr.mxu0 0.0
        %1285 = vmatpush1.msra.mxu0 0.0
        %1286 = vmatprep.subr.mxu0 0.0
        %1287 = vmatpush1.msra.mxu0 0.0
        %1288 = vmatprep.subr.mxu0 0.0
        %1289 = vmatpush1.msra.mxu0 0.0
        %1290 = vmatprep.subr.mxu0 0.0
        %1291 = vmatpush1.msra.mxu0 0.0
        %1292 = vmatprep.subr.mxu0 0.0
        %1293 = vmatpush1.msra.mxu0 0.0
        %1294 = vmatprep.subr.mxu0 0.0
        %1295 = vmatpush1.msra.mxu0 0.0
        %1296 = vmatprep.subr.mxu0 0.0
        %1297 = vmatpush1.msra.mxu0 0.0
        %1298 = vmatprep.subr.mxu0 0.0
        %1299 = vmatpush1.msra.mxu0 0.0
        %1300 = vmatprep.subr.mxu0 0.0
        %1301 = vmatpush1.msra.mxu0 0.0
        %1302 = vmatprep.subr.mxu0 0.0
        %1303 = vmatpush1.msra.mxu0 0.0
        %1304 = vmatprep.subr.mxu0 0.0
        %1305 = vmatpush1.msra.mxu0 0.0
        %1306 = vmatprep.subr.mxu0 0.0
        %1307 = vmatpush1.msra.mxu0 0.0
        %1308 = vmatprep.subr.mxu0 0.0
        %1309 = vmatpush1.msra.mxu0 0.0
        %1310 = vmatprep.subr.mxu0 0.0
        %1311 = vmatpush1.msra.mxu0 0.0
        %1312 = vmatprep.subr.mxu0 0.0
        %1313 = vmatpush1.msra.mxu0 0.0
        %1314 = vmatprep.subr.mxu0 0.0
        %1315 = vmatpush1.msra.mxu0 0.0
        %1316 = vmatprep.subr.mxu0 0.0
        %1317 = vmatpush1.msra.mxu0 0.0
        %1318 = vmatprep.subr.mxu0 0.0
        %1319 = vmatpush1.msra.mxu0 0.0
        %1320 = vmatprep.subr.mxu0 0.0
        %1321 = vmatpush1.msra.mxu0 0.0
        %1322 = vmatprep.subr.mxu0 0.0
        %1323 = vmatpush1.msra.mxu0 0.0
        %1324 = vmatprep.subr.mxu0 0.0
        %1325 = vmatpush1.msra.mxu0 0.0
        %1326 = vmatprep.mubr.f32.mxu0 0.0
        %1327 = vmatmul.mubr.f32.gmra.mrb[0].mxu0 %v1260
        %v1328 = vpop.f32.mrb[0].mxu0
        %v1329 = vadd.f32 0.0, %v1328
        %v1330 = vpop.f32.mrb[0].mxu0
        %1331 = vdwg.mxu0
        %1333 = vrot.lane.b32.xlu0 %v999, 8
        %v1334 = vpop.permute.xlu0 %1333
        %1337 = vrot.lane.b32.xlu0 %v1164, 16
        %v1338 = vpop.permute.xlu0 %1337
        %1341 = vrot.lane.b32.xlu0 %v1329, 24
        %v1342 = vpop.permute.xlu0 %1341
        %v1344 = vsel %vm675, %v833, %v1334
        %vm1345 = vcmask 130048
        %v1346 = vsel %vm1345, %v1344, %v1338
        %vm1347 = vcmask 195584
        %v1348 = vsel %vm1347, %v1346, %v1342
        %v1349 = vld [vmem:[#allocation13] sm:$0xff]
        %v1350 = vld [vmem:[#allocation13 + $0x8] sm:$0xff]
        %v1351 = vld [vmem:[#allocation13 + $0x10] sm:$0xff]
        %v1352 = vld [vmem:[#allocation13 + $0x18] sm:$0xff]
        %v1353 = vld [vmem:[#allocation14] sm:$0x1]
        %v1355 = vlaneseq
        %v1356 = vshrl.u32 %v1355, 7
        %v1357 = vsub.s32 0, %v1356
        %v1358 = vrot.slane %v1353, %v1357
        %v1361 = vsel %vm418, %v1348, 0
        %1363 = vmatprep.subr.mxu0 0.0
        %1364 = vmatpush1.msra.mxu0 %v1349
        %1365 = vmatprep.subr.mxu0 0.0
        %1366 = vmatpush1.msra.mxu0 %v1350
        %1367 = vmatprep.subr.mxu0 0.0
        %1368 = vmatpush1.msra.mxu0 %v1351
        %1369 = vmatprep.subr.mxu0 0.0
        %1370 = vmatpush1.msra.mxu0 %v1352
        %1371 = vmatprep.subr.mxu0 0.0
        %1372 = vmatpush1.msra.mxu0 0.0
        %1373 = vmatprep.subr.mxu0 0.0
        %1374 = vmatpush1.msra.mxu0 0.0
        %1375 = vmatprep.subr.mxu0 0.0
        %1376 = vmatpush1.msra.mxu0 0.0
        %1377 = vmatprep.subr.mxu0 0.0
        %1378 = vmatpush1.msra.mxu0 0.0
        %1379 = vmatprep.subr.mxu0 0.0
        %1380 = vmatpush1.msra.mxu0 0.0
        %1381 = vmatprep.subr.mxu0 0.0
        %1382 = vmatpush1.msra.mxu0 0.0
        %1383 = vmatprep.subr.mxu0 0.0
        %1384 = vmatpush1.msra.mxu0 0.0
        %1385 = vmatprep.subr.mxu0 0.0
        %1386 = vmatpush1.msra.mxu0 0.0
        %1387 = vmatprep.subr.mxu0 0.0
        %1388 = vmatpush1.msra.mxu0 0.0
        %1389 = vmatprep.subr.mxu0 0.0
        %1390 = vmatpush1.msra.mxu0 0.0
        %1391 = vmatprep.subr.mxu0 0.0
        %1392 = vmatpush1.msra.mxu0 0.0
        %1393 = vmatprep.subr.mxu0 0.0
        %1394 = vmatpush1.msra.mxu0 0.0
        %1395 = vmatprep.subr.mxu0 0.0
        %1396 = vmatpush1.msra.mxu0 0.0
        %1397 = vmatprep.subr.mxu0 0.0
        %1398 = vmatpush1.msra.mxu0 0.0
        %1399 = vmatprep.subr.mxu0 0.0
        %1400 = vmatpush1.msra.mxu0 0.0
        %1401 = vmatprep.subr.mxu0 0.0
        %1402 = vmatpush1.msra.mxu0 0.0
        %1403 = vmatprep.subr.mxu0 0.0
        %1404 = vmatpush1.msra.mxu0 0.0
        %1405 = vmatprep.subr.mxu0 0.0
        %1406 = vmatpush1.msra.mxu0 0.0
        %1407 = vmatprep.subr.mxu0 0.0
        %1408 = vmatpush1.msra.mxu0 0.0
        %1409 = vmatprep.subr.mxu0 0.0
        %1410 = vmatpush1.msra.mxu0 0.0
        %1411 = vmatprep.subr.mxu0 0.0
        %1412 = vmatpush1.msra.mxu0 0.0
        %1413 = vmatprep.subr.mxu0 0.0
        %1414 = vmatpush1.msra.mxu0 0.0
        %1415 = vmatprep.subr.mxu0 0.0
        %1416 = vmatpush1.msra.mxu0 0.0
        %1417 = vmatprep.subr.mxu0 0.0
        %1418 = vmatpush1.msra.mxu0 0.0
        %1419 = vmatprep.subr.mxu0 0.0
        %1420 = vmatpush1.msra.mxu0 0.0
        %1421 = vmatprep.subr.mxu0 0.0
        %1422 = vmatpush1.msra.mxu0 0.0
        %1423 = vmatprep.subr.mxu0 0.0
        %1424 = vmatpush1.msra.mxu0 0.0
        %1425 = vmatprep.subr.mxu0 0.0
        %1426 = vmatpush1.msra.mxu0 0.0
        %1427 = vmatprep.mubr.f32.mxu0 0.0
        %1428 = vmatmul.mubr.f32.gmra.mrb[0].mxu0 %v1361
        %v1429 = vpop.f32.mrb[0].mxu0
        %v1430 = vadd.f32 %v1358, %v1429
        %v1431 = vpop.f32.mrb[0].mxu0
        %1432 = vdwg.mxu0
        %1433 = vst.msk [vmem:[%s416] sm:$0xff] %vm418, %v1430
        %s1434 = sand.u32 %s210, 1
        %s1435 = scalar_lea.sflag [#allocation4], %s1434
        %s1436 = sand.u32 %s210, 1
        %s1437 = smul.addr %s1436, 8
        %s1438 = scalar_lea.vmem [#allocation16], %s1437
        // Predicated region
        $region85: #{tpu_custom_call.1} parent=51 // pred_check
          %p1439 = pneg %p220
        $region86: #{tpu_custom_call.1} parent=51 // pred_check_branch
          %1441 = sbr.rel (%p1439) target = $region88
        $region87: #{tpu_custom_call.1} parent=51 // pred_region
          %s1443 = ssub.s32 128, 128
          %1444 = vsyncadd %s1435, %s1443
          %s1445 = smul.addr %s29, 128
          %s1446 = scalar_lea.hbm %s8, %s1445
          %s1448 = sshll.u32 %s1438, 4
          %s1449 = int_to_ptr.vmem [resolvable:$true] %s1448
          %1451 = dma.vmem_to_hbm [thread:$0]  %s1449, 128, %s1446, %s1435
        $region88: #{tpu_custom_call.1} parent=51 // pred_fallthru
          _
      $region52: #{tpu_custom_call.1} parent=5 // pred_fallthru
        _
      %p1452 = scmp.le.s32.totalorder 2, %s24
      // Predicated region
      $region89: #{tpu_custom_call.1} parent=5 // pred_check
        %p1453 = pneg %p1452
      $region90: #{tpu_custom_call.1} parent=5 // pred_check_branch
        %1455 = sbr.rel (%p1453) target = $region92
      $region91: #{tpu_custom_call.1} parent=5 // pred_region
        %s1456 = ssub.s32 %s24, 2
        // Predicated region
        $region93: #{tpu_custom_call.1} parent=91 // pred_check
          %p1457 = pneg %p226
        $region94: #{tpu_custom_call.1} parent=91 // pred_check_branch
          %1459 = sbr.rel (%p1457) target = $region96
        $region95: #{tpu_custom_call.1} parent=91 // pred_region
          %s1460 = sand.u32 %s211, 1
          %s1461 = scalar_lea.sflag [#allocation4], %s1460
          %s1462 = sand.u32 %s211, 1
          %s1463 = smul.addr %s1462, 8
          %s1464 = scalar_lea.vmem [#allocation16], %s1463
          %1465 = dma.done %s1461, 128
        $region96: #{tpu_custom_call.1} parent=91 // pred_fallthru
          _
      $region92: #{tpu_custom_call.1} parent=5 // pred_fallthru
        _
    $region6: #{tpu_custom_call.1} parent=1 // loop_footer
      %s28 = sadd.s32 1, %s24
    $region7: #{tpu_custom_call.1} parent=1 // loop_footer_branch
      %23 = sbr.rel target = $region3
    $region8: #{tpu_custom_call.1} parent=1 // loop_exit
      _
    %1466 = vsyncpa [#allocation3], 1
    %s1467 = scalar_lea.sflag [#allocation3], 1
    %1468 = vsyncpa %s1467, 1
    %1469 = vsyncpa [#allocation6], 1
    %1470 = vsyncpa [#allocation9], 1
    %1471 = vsyncpa [#allocation12], 1
    %1472 = vsyncpa [#allocation15], 1
    %1473 = vsyncpa [#allocation4], 1
    %s1474 = scalar_lea.sflag [#allocation4], 1
    %1475 = vsyncpa %s1474, 1

</llo_original>
